<compile_context>
chip_gen: v7x
topology: tpu7x:2x2x1
jax: 0.10.0
libtpu: 0.0.40
codegen_flags: <defaults>
</compile_context>

<pallas_src>
import jax
import jax.numpy as jnp
from jax.experimental import pallas as pl
from jax.experimental.pallas import tpu as pltpu


# ----------------------------------------------------------------------------- #
# Helpers
# ----------------------------------------------------------------------------- #
def _round_up(x: int, m: int) -> int:
    return ((x + m - 1) // m) * m


def _vmem_limit_bytes():
    """~80% of physical VMEM (~102 MiB v5e/v6e, ~51 MiB v7x); None -> default."""
    try:
        cap = int(pltpu.get_tpu_info().vmem_capacity_bytes)
        return max(32 << 20, min(int(cap * 0.8), 110 << 20))
    except Exception:
        return None  # keep the compiler's scoped default


def _choose_tile_n(n, din, emb_p, g_pad, weight_bytes, vmem_limit) -> int:
    """Budget-driven node tile, multiple of 128, capped so tiny inputs aren't over-padded."""
    budget = vmem_limit if vmem_limit is not None else (32 << 20)
    # Half the budget for weights / accumulator / compiler scratch; the rest for
    # the double-buffered x tile, in-flight f32 intermediates and the onehot tile.
    avail = max(budget // 2 - 2 * weight_bytes - g_pad * emb_p * 4, 2 << 20)
    per_row = 2 * din * 4 + 8 * emb_p * 4 + 2 * g_pad
    tile = max(128, min(avail // per_row, 2048))
    tile = (tile // 128) * 128
    tile = min(tile, _round_up(max(n, 1), 128))
    return max(128, tile)


# ----------------------------------------------------------------------------- #
# Fused kernel: encoder + node-level MLP + mean pooling + prediction MLP
# ----------------------------------------------------------------------------- #
def _fused_mlp_kernel(batch_ref, x_ref, cnt_ref,
                      wenc_ref, benc_ref, w1_ref, b1_ref, w2_ref, b2_ref,
                      wp1_ref, bp1_ref, wp2_ref, bp2_ref,
                      o_ref, acc_ref):
    step = pl.program_id(0)

    @pl.when(step == 0)
    def _init():
        acc_ref[...] = jnp.zeros_like(acc_ref)

    # --- node_encoder + node_level_mlp (bf16 MXU inputs, f32 accumulation) ---
    x = x_ref[...].astype(jnp.bfloat16)
    h = jnp.dot(x, wenc_ref[...], preferred_element_type=jnp.float32) + benc_ref[...]
    h = jnp.dot(h.astype(jnp.bfloat16), w1_ref[...],
                preferred_element_type=jnp.float32) + b1_ref[...]
    h = jnp.maximum(h, 0.0)
    h = jnp.dot(h.astype(jnp.bfloat16), w2_ref[...],
                preferred_element_type=jnp.float32) + b2_ref[...]

    # --- mean-pool accumulation: one-hot built in-register, directly in bf16 ---
    seg = batch_ref[...]                                    # [1, tile_n] int32
    g_pad = acc_ref.shape[0]
    gid = jax.lax.broadcasted_iota(jnp.int32, (g_pad, seg.shape[1]), 0)
    onehot = (gid == seg).astype(jnp.bfloat16)              # exact 0/1 in bf16
    acc_ref[...] += jnp.dot(onehot, h.astype(jnp.bfloat16),
                            preferred_element_type=jnp.float32)

    # --- finalize: mean + prediction_mlp, lane-dense padded output store ---
    @pl.when(step == pl.num_programs(0) - 1)
    def _finalize():
        # Empty graphs: count clamped to 1 -> bias-only prediction (no NaNs).
        pooled = acc_ref[...] / jnp.maximum(cnt_ref[...], 1.0)
        z = jnp.dot(pooled.astype(jnp.bfloat16), wp1_ref[...],
                    preferred_element_type=jnp.float32) + bp1_ref[...]
        z = jnp.maximum(z, 0.0)
        pred = jnp.dot(z.astype(jnp.bfloat16), wp2_ref[...],
                       preferred_element_type=jnp.float32) + bp2_ref[...]
        o_ref[...] = pred.astype(o_ref.dtype)


def fused_graph_mlp(params, x, batch, num_graphs):
    """x: [N, Din] (f32 or bf16); batch: [N] int32 -> [num_graphs, out_dim] f32."""
    n, din = x.shape
    wenc, benc = params["encoder"]
    (w1, b1), (w2, b2) = params["node_mlp"]
    (wp1, bp1), (wp2, bp2) = params["pred_mlp"]

    emb = wenc.shape[1]
    hidden = w1.shape[1]
    out_dim = wp2.shape[1]

    emb_p = _round_up(emb, 128)
    hid_p = _round_up(hidden, 128)
    out_p = _round_up(out_dim, 128)
    g_pad = _round_up(max(num_graphs, 1), 8)

    # Zero-pad weights/biases to lane-dense, MXU-friendly shapes (exact semantics).
    def pad_w(w, r, c):
        return jnp.pad(w, ((0, r - w.shape[0]), (0, c - w.shape[1]))).astype(jnp.bfloat16)

    def pad_b(b, c):
        b = b.reshape(1, -1)
        return jnp.pad(b, ((0, 0), (0, c - b.shape[1]))).astype(jnp.float32)

    wenc_p = pad_w(wenc, din, emb_p);   benc_p = pad_b(benc, emb_p)
    w1_p = pad_w(w1, emb_p, hid_p);     b1_p = pad_b(b1, hid_p)
    w2_p = pad_w(w2, hid_p, emb_p);     b2_p = pad_b(b2, emb_p)
    wp1_p = pad_w(wp1, emb_p, hid_p);   bp1_p = pad_b(bp1, hid_p)
    wp2_p = pad_w(wp2, hid_p, out_p);   bp2_p = pad_b(bp2, out_p)

    weight_bytes = sum(int(a.size) * a.dtype.itemsize
                       for a in (wenc_p, w1_p, w2_p, wp1_p, wp2_p))

    vmem_limit = _vmem_limit_bytes()
    tile_n = _choose_tile_n(n, din, emb_p, g_pad, weight_bytes, vmem_limit)
    n_pad = _round_up(max(n, 1), tile_n)

    # Pad nodes; padded rows carry a sentinel segment id (g_pad) matching no graph.
    x_pad = jnp.pad(x, ((0, n_pad - n), (0, 0)))
    batch_row = jnp.full((1, n_pad), g_pad, dtype=jnp.int32)
    batch_row = batch_row.at[0, :n].set(batch.astype(jnp.int32))
    # Per-graph node counts, precomputed once (drops in-kernel count reduction).
    counts = jnp.zeros((g_pad, 1), jnp.float32).at[batch, 0].add(1.0)

    operands = (batch_row, x_pad, counts,
                wenc_p, benc_p, w1_p, b1_p, w2_p, b2_p,
                wp1_p, bp1_p, wp2_p, bp2_p)

    def run(single_buffer_weights):
        def const_spec(shape):
            # Grid-invariant blocks stay resident in VMEM; single-buffer them so
            # they don't cost 2x VMEM (matters on v7x's 64 MiB).
            if single_buffer_weights:
                return pl.BlockSpec(shape, lambda i: (0, 0),
                                    pipeline_mode=pl.Buffered(1))
            return pl.BlockSpec(shape, lambda i: (0, 0))

        in_specs = [
            pl.BlockSpec((1, tile_n), lambda i: (0, i)),       # batch ids (per tile)
            pl.BlockSpec((tile_n, din), lambda i: (i, 0)),     # node features (per tile)
            const_spec((g_pad, 1)),                            # per-graph counts
            const_spec((din, emb_p)), const_spec((1, emb_p)),  # encoder
            const_spec((emb_p, hid_p)), const_spec((1, hid_p)),  # node mlp 0
            const_spec((hid_p, emb_p)), const_spec((1, emb_p)),  # node mlp 1
            const_spec((emb_p, hid_p)), const_spec((1, hid_p)),  # pred mlp 0
            const_spec((hid_p, out_p)), const_spec((1, out_p)),  # pred mlp 1
        ]
        return pl.pallas_call(
            _fused_mlp_kernel,
            out_shape=jax.ShapeDtypeStruct((g_pad, out_p), jnp.float32),
            grid=(n_pad // tile_n,),
            in_specs=in_specs,
            # Constant index map -> output stays resident; written only at finalize.
            out_specs=pl.BlockSpec((g_pad, out_p), lambda i: (0, 0)),
            scratch_shapes=[pltpu.VMEM((g_pad, emb_p), jnp.float32)],
            compiler_params=pltpu.CompilerParams(
                # Accumulator pattern -> the node-tile axis must stay "arbitrary".
                dimension_semantics=("arbitrary",),
                vmem_limit_bytes=vmem_limit,
            ),
        )(*operands)

    try:
        out = run(single_buffer_weights=True)
    except Exception:
        # Some JAX/Mosaic builds reject pl.Buffered(1); fall back to the default
        # double-buffered weight blocks (correctness unchanged, slightly more VMEM).
        out = run(single_buffer_weights=False)

    return out[:num_graphs, :out_dim]


# ----------------------------------------------------------------------------- #
# Full forward pass
# ----------------------------------------------------------------------------- #
def mlp_forward(params, x, batch, num_graphs, num_classes, num_tasks=1):
    pred = fused_graph_mlp(params, x, batch, num_graphs)   # .float() implicit (f32 out)
    if num_tasks == 1:
        return pred.reshape(-1, num_classes)
    return pred.reshape(-1, num_tasks, num_classes)


# ----------------------------------------------------------------------------- #
# Parameter construction (deterministic, mimics torch.nn.Linear init ranges)
# ----------------------------------------------------------------------------- #
def make_linear_params(key, din, dout):
    kw, kb = jax.random.split(key)
    bound = 1.0 / jnp.sqrt(jnp.float32(din))
    w = jax.random.uniform(kw, (din, dout), jnp.float32, -bound, bound)
    b = jax.random.uniform(kb, (dout,), jnp.float32, -bound, bound)
    return w, b


def build_mlp_params(key, num_layers, in_dim, out_dim, hidden_dim):
    dims = [in_dim] + [hidden_dim] * (num_layers - 1) + [out_dim]
    keys = jax.random.split(key, num_layers)
    return [make_linear_params(k, dims[i], dims[i + 1]) for i, k in enumerate(keys)]


# Pure-JAX f32 reference for a loose numerical check against the bf16 kernel.
def reference_forward(params, x, batch, num_graphs, num_classes):
    wenc, benc = params["encoder"]
    h = x @ wenc + benc
    (w1, b1), (w2, b2) = params["node_mlp"]
    h = jnp.maximum(h @ w1 + b1, 0.0)
    h = h @ w2 + b2
    onehot = (batch[None, :] == jnp.arange(num_graphs)[:, None]).astype(jnp.float32)
    pooled = (onehot @ h) / jnp.maximum(onehot.sum(axis=1, keepdims=True), 1.0)
    (wp1, bp1), (wp2, bp2) = params["pred_mlp"]
    z = jnp.maximum(pooled @ wp1 + bp1, 0.0)
    pred = z @ wp2 + bp2
    return pred.reshape(-1, num_classes)


if __name__ == "__main__":
    # Small deterministic problem.
    num_nodes = 16
    in_feat = 8
    emb_dim = 32
    hidden_dim = emb_dim // 2
    num_classes = 4
    num_tasks = 1
    num_graphs = 2
    num_node_level_layers = 2
    num_graph_level_layers = 2

    root = jax.random.PRNGKey(0)
    k_x, k_enc, k_node, k_pred = jax.random.split(root, 4)

    x = jax.random.normal(k_x, (num_nodes, in_feat), jnp.float32)
    # First 9 nodes -> graph 0, remaining 7 -> graph 1.
    batch = jnp.array([0] * 9 + [1] * 7, dtype=jnp.int32)

    params = {
        "encoder": make_linear_params(k_enc, in_feat, emb_dim),
        "node_mlp": build_mlp_params(
            k_node, num_node_level_layers, emb_dim, emb_dim, hidden_dim
        ),
        "pred_mlp": build_mlp_params(
            k_pred, num_graph_level_layers, emb_dim, num_tasks * num_classes, hidden_dim
        ),
    }

    out = mlp_forward(params, x, batch, num_graphs, num_classes, num_tasks)
    jax.block_until_ready(out)

    assert out.shape == (num_graphs, num_classes), out.shape
    assert out.dtype == jnp.float32

    ref = reference_forward(params, x, batch, num_graphs, num_classes)
    assert bool(jnp.allclose(out, ref, rtol=0.1, atol=0.1)), (out, ref)

    # TODO(synk): dropout is a no-op here (eval mode); training-mode dropout would
    # need pltpu.prng_seed / pltpu.prng_random_bits inside the fused kernel.
    print("KERNEL_OK")
</pallas_src>

<mosaic_0001>
module attributes {stable_mosaic.version = 11 : i64} {
  func.func @_fused_mlp_kernel(%arg0: i32, %arg1: memref<1x128xi32, #tpu.memory_space<vmem>>, %arg2: memref<128x8xf32, #tpu.memory_space<vmem>>, %arg3: memref<8x1xf32, #tpu.memory_space<vmem>>, %arg4: memref<8x128xbf16, #tpu.memory_space<vmem>>, %arg5: memref<1x128xf32, #tpu.memory_space<vmem>>, %arg6: memref<128x128xbf16, #tpu.memory_space<vmem>>, %arg7: memref<1x128xf32, #tpu.memory_space<vmem>>, %arg8: memref<128x128xbf16, #tpu.memory_space<vmem>>, %arg9: memref<1x128xf32, #tpu.memory_space<vmem>>, %arg10: memref<128x128xbf16, #tpu.memory_space<vmem>>, %arg11: memref<1x128xf32, #tpu.memory_space<vmem>>, %arg12: memref<128x128xbf16, #tpu.memory_space<vmem>>, %arg13: memref<1x128xf32, #tpu.memory_space<vmem>>, %arg14: memref<8x128xf32, #tpu.memory_space<vmem>>, %arg15: memref<8x128xf32, #tpu.memory_space<vmem>>) attributes {dimension_semantics = [#tpu.dimension_semantics<arbitrary>], iteration_bounds = array<i64: 1>, scalar_prefetch = 0 : i64, scratch_operands = 1 : i64, tpu.core_type = #tpu.core_type<tc>, window_params = [{transform_indices = @transform_0, window_bounds = array<i64: 1, 128>}, {transform_indices = @transform_1, window_bounds = array<i64: 128, 8>}, {pipeline_mode = #tpu.pipeline_mode<synchronous>, transform_indices = @transform_2, window_bounds = array<i64: 8, 1>}, {pipeline_mode = #tpu.pipeline_mode<synchronous>, transform_indices = @transform_3, window_bounds = array<i64: 8, 128>}, {pipeline_mode = #tpu.pipeline_mode<synchronous>, transform_indices = @transform_4, window_bounds = array<i64: 1, 128>}, {pipeline_mode = #tpu.pipeline_mode<synchronous>, transform_indices = @transform_5, window_bounds = array<i64: 128, 128>}, {pipeline_mode = #tpu.pipeline_mode<synchronous>, transform_indices = @transform_6, window_bounds = array<i64: 1, 128>}, {pipeline_mode = #tpu.pipeline_mode<synchronous>, transform_indices = @transform_7, window_bounds = array<i64: 128, 128>}, {pipeline_mode = #tpu.pipeline_mode<synchronous>, transform_indices = @transform_8, window_bounds = array<i64: 1, 128>}, {pipeline_mode = #tpu.pipeline_mode<synchronous>, transform_indices = @transform_9, window_bounds = array<i64: 128, 128>}, {pipeline_mode = #tpu.pipeline_mode<synchronous>, transform_indices = @transform_10, window_bounds = array<i64: 1, 128>}, {pipeline_mode = #tpu.pipeline_mode<synchronous>, transform_indices = @transform_11, window_bounds = array<i64: 128, 128>}, {pipeline_mode = #tpu.pipeline_mode<synchronous>, transform_indices = @transform_12, window_bounds = array<i64: 1, 128>}, {pipeline_mode = #tpu.pipeline_mode<synchronous>, transform_indices = @transform_13, window_bounds = array<i64: 8, 128>}]} {
    %c0_i32 = arith.constant 0 : i32
    %0 = arith.cmpi eq, %arg0, %c0_i32 : i32
    %1 = arith.extui %0 : i1 to i32
    %c0_i32_0 = arith.constant 0 : i32
    %2 = arith.cmpi ne, %1, %c0_i32_0 : i32
    scf.if %2 {
      %cst_26 = arith.constant 0.000000e+00 : f32
      %39 = vector.broadcast %cst_26 : f32 to vector<8x128xf32>
      %c0_27 = arith.constant 0 : index
      %c0_28 = arith.constant 0 : index
      %40 = vector.load %arg15[%c0_27, %c0_28] : memref<8x128xf32, #tpu.memory_space<vmem>>, vector<8x128xf32>
      tpu.vector_store %arg15[%c0_27, %c0_28], %39 {strides = array<i32>} : memref<8x128xf32, #tpu.memory_space<vmem>>, vector<8x128xf32>,
    } else {
    }
    %c0 = arith.constant 0 : index
    %c0_1 = arith.constant 0 : index
    %3 = vector.load %arg2[%c0, %c0_1] : memref<128x8xf32, #tpu.memory_space<vmem>>, vector<128x8xf32>
    %4 = arith.truncf %3 : vector<128x8xf32> to vector<128x8xbf16>
    %c0_2 = arith.constant 0 : index
    %c0_3 = arith.constant 0 : index
    %5 = vector.load %arg4[%c0_2, %c0_3] : memref<8x128xbf16, #tpu.memory_space<vmem>>, vector<8x128xbf16>
    %cst = arith.constant dense<0.000000e+00> : vector<128x128xf32>
    %6 = tpu.matmul %4, %5, %cst {dimension_numbers = #tpu.dot_dimension_numbers<[1], [0], [0], [1], [0, 0, 1, 1], [], []>} : vector<128x8xbf16>, vector<8x128xbf16>, vector<128x128xf32> -> vector<128x128xf32>
    %c0_4 = arith.constant 0 : index
    %c0_5 = arith.constant 0 : index
    %7 = vector.load %arg5[%c0_4, %c0_5] : memref<1x128xf32, #tpu.memory_space<vmem>>, vector<1x128xf32>
    %8 = vector.broadcast %7 : vector<1x128xf32> to vector<128x128xf32>
    %9 = arith.addf %6, %8 : vector<128x128xf32>
    %10 = arith.truncf %9 : vector<128x128xf32> to vector<128x128xbf16>
    %c0_6 = arith.constant 0 : index
    %c0_7 = arith.constant 0 : index
    %11 = vector.load %arg6[%c0_6, %c0_7] : memref<128x128xbf16, #tpu.memory_space<vmem>>, vector<128x128xbf16>
    %cst_8 = arith.constant dense<0.000000e+00> : vector<128x128xf32>
    %12 = tpu.matmul %10, %11, %cst_8 {dimension_numbers = #tpu.dot_dimension_numbers<[1], [0], [0], [1], [0, 0, 1, 1], [], []>} : vector<128x128xbf16>, vector<128x128xbf16>, vector<128x128xf32> -> vector<128x128xf32>
    %c0_9 = arith.constant 0 : index
    %c0_10 = arith.constant 0 : index
    %13 = vector.load %arg7[%c0_9, %c0_10] : memref<1x128xf32, #tpu.memory_space<vmem>>, vector<1x128xf32>
    %14 = vector.broadcast %13 : vector<1x128xf32> to vector<128x128xf32>
    %15 = arith.addf %12, %14 : vector<128x128xf32>
    %cst_11 = arith.constant 0.000000e+00 : f32
    %16 = vector.broadcast %cst_11 : f32 to vector<128x128xf32>
    %17 = arith.maximumf %15, %16 : vector<128x128xf32>
    %18 = arith.truncf %17 : vector<128x128xf32> to vector<128x128xbf16>
    %c0_12 = arith.constant 0 : index
    %c0_13 = arith.constant 0 : index
    %19 = vector.load %arg8[%c0_12, %c0_13] : memref<128x128xbf16, #tpu.memory_space<vmem>>, vector<128x128xbf16>
    %cst_14 = arith.constant dense<0.000000e+00> : vector<128x128xf32>
    %20 = tpu.matmul %18, %19, %cst_14 {dimension_numbers = #tpu.dot_dimension_numbers<[1], [0], [0], [1], [0, 0, 1, 1], [], []>} : vector<128x128xbf16>, vector<128x128xbf16>, vector<128x128xf32> -> vector<128x128xf32>
    %c0_15 = arith.constant 0 : index
    %c0_16 = arith.constant 0 : index
    %21 = vector.load %arg9[%c0_15, %c0_16] : memref<1x128xf32, #tpu.memory_space<vmem>>, vector<1x128xf32>
    %22 = vector.broadcast %21 : vector<1x128xf32> to vector<128x128xf32>
    %23 = arith.addf %20, %22 : vector<128x128xf32>
    %c0_17 = arith.constant 0 : index
    %c0_18 = arith.constant 0 : index
    %24 = vector.load %arg1[%c0_17, %c0_18] : memref<1x128xi32, #tpu.memory_space<vmem>>, vector<1x128xi32>
    %25 = tpu.iota {dimensions = array<i32: 0>} : vector<8x128xi32>
    %26 = vector.broadcast %24 : vector<1x128xi32> to vector<8x128xi32>
    %27 = arith.cmpi eq, %25, %26 : vector<8x128xi32>
    %28 = arith.extui %27 : vector<8x128xi1> to vector<8x128xi32>
    %29 = arith.sitofp %28 : vector<8x128xi32> to vector<8x128xf32>
    %30 = arith.truncf %29 : vector<8x128xf32> to vector<8x128xbf16>
    %c0_19 = arith.constant 0 : index
    %c0_20 = arith.constant 0 : index
    %31 = vector.load %arg15[%c0_19, %c0_20] : memref<8x128xf32, #tpu.memory_space<vmem>>, vector<8x128xf32>
    %32 = arith.truncf %23 : vector<128x128xf32> to vector<128x128xbf16>
    %cst_21 = arith.constant dense<0.000000e+00> : vector<8x128xf32>
    %33 = tpu.matmul %30, %32, %cst_21 {dimension_numbers = #tpu.dot_dimension_numbers<[1], [0], [0], [1], [0, 0, 1, 1], [], []>} : vector<8x128xbf16>, vector<128x128xbf16>, vector<8x128xf32> -> vector<8x128xf32>
    %34 = arith.addf %31, %33 : vector<8x128xf32>
    %c0_22 = arith.constant 0 : index
    %c0_23 = arith.constant 0 : index
    %35 = vector.load %arg15[%c0_22, %c0_23] : memref<8x128xf32, #tpu.memory_space<vmem>>, vector<8x128xf32>
    tpu.vector_store %arg15[%c0_22, %c0_23], %34 {strides = array<i32>} : memref<8x128xf32, #tpu.memory_space<vmem>>, vector<8x128xf32>,
    %c0_i32_24 = arith.constant 0 : i32
    %36 = arith.cmpi eq, %arg0, %c0_i32_24 : i32
    %37 = arith.extui %36 : i1 to i32
    %c0_i32_25 = arith.constant 0 : i32
    %38 = arith.cmpi ne, %37, %c0_i32_25 : i32
    scf.if %38 {
      %c0_26 = arith.constant 0 : index
      %c0_27 = arith.constant 0 : index
      %39 = vector.load %arg15[%c0_26, %c0_27] : memref<8x128xf32, #tpu.memory_space<vmem>>, vector<8x128xf32>
      %c0_28 = arith.constant 0 : index
      %c0_29 = arith.constant 0 : index
      %40 = vector.load %arg3[%c0_28, %c0_29] : memref<8x1xf32, #tpu.memory_space<vmem>>, vector<8x1xf32>
      %cst_30 = arith.constant 1.000000e+00 : f32
      %41 = vector.broadcast %cst_30 : f32 to vector<8x1xf32>
      %42 = arith.maximumf %40, %41 : vector<8x1xf32>
      %43 = vector.broadcast %42 : vector<8x1xf32> to vector<8x128xf32>
      %44 = arith.divf %39, %43 : vector<8x128xf32>
      %45 = arith.truncf %44 : vector<8x128xf32> to vector<8x128xbf16>
      %c0_31 = arith.constant 0 : index
      %c0_32 = arith.constant 0 : index
      %46 = vector.load %arg10[%c0_31, %c0_32] : memref<128x128xbf16, #tpu.memory_space<vmem>>, vector<128x128xbf16>
      %cst_33 = arith.constant dense<0.000000e+00> : vector<8x128xf32>
      %47 = tpu.matmul %45, %46, %cst_33 {dimension_numbers = #tpu.dot_dimension_numbers<[1], [0], [0], [1], [0, 0, 1, 1], [], []>} : vector<8x128xbf16>, vector<128x128xbf16>, vector<8x128xf32> -> vector<8x128xf32>
      %c0_34 = arith.constant 0 : index
      %c0_35 = arith.constant 0 : index
      %48 = vector.load %arg11[%c0_34, %c0_35] : memref<1x128xf32, #tpu.memory_space<vmem>>, vector<1x128xf32>
      %49 = vector.broadcast %48 : vector<1x128xf32> to vector<8x128xf32>
      %50 = arith.addf %47, %49 : vector<8x128xf32>
      %cst_36 = arith.constant 0.000000e+00 : f32
      %51 = vector.broadcast %cst_36 : f32 to vector<8x128xf32>
      %52 = arith.maximumf %50, %51 : vector<8x128xf32>
      %53 = arith.truncf %52 : vector<8x128xf32> to vector<8x128xbf16>
      %c0_37 = arith.constant 0 : index
      %c0_38 = arith.constant 0 : index
      %54 = vector.load %arg12[%c0_37, %c0_38] : memref<128x128xbf16, #tpu.memory_space<vmem>>, vector<128x128xbf16>
      %cst_39 = arith.constant dense<0.000000e+00> : vector<8x128xf32>
      %55 = tpu.matmul %53, %54, %cst_39 {dimension_numbers = #tpu.dot_dimension_numbers<[1], [0], [0], [1], [0, 0, 1, 1], [], []>} : vector<8x128xbf16>, vector<128x128xbf16>, vector<8x128xf32> -> vector<8x128xf32>
      %c0_40 = arith.constant 0 : index
      %c0_41 = arith.constant 0 : index
      %56 = vector.load %arg13[%c0_40, %c0_41] : memref<1x128xf32, #tpu.memory_space<vmem>>, vector<1x128xf32>
      %57 = vector.broadcast %56 : vector<1x128xf32> to vector<8x128xf32>
      %58 = arith.addf %55, %57 : vector<8x128xf32>
      %c0_42 = arith.constant 0 : index
      %c0_43 = arith.constant 0 : index
      %59 = vector.load %arg14[%c0_42, %c0_43] : memref<8x128xf32, #tpu.memory_space<vmem>>, vector<8x128xf32>
      tpu.vector_store %arg14[%c0_42, %c0_43], %58 {strides = array<i32>} : memref<8x128xf32, #tpu.memory_space<vmem>>, vector<8x128xf32>,
    } else {
    }
    return
  }
  func.func @transform_0(%arg0: i32) -> (i32, i32) {
    %c0_i32 = arith.constant 0 : i32
    %c0_i32_0 = arith.constant 0 : i32
    return %c0_i32, %arg0 : i32, i32
  }
  func.func @transform_1(%arg0: i32) -> (i32, i32) {
    %c0_i32 = arith.constant 0 : i32
    %c0_i32_0 = arith.constant 0 : i32
    return %arg0, %c0_i32 : i32, i32
  }
  func.func @transform_2(%arg0: i32) -> (i32, i32) {
    %c0_i32 = arith.constant 0 : i32
    %c0_i32_0 = arith.constant 0 : i32
    %c0_i32_1 = arith.constant 0 : i32
    return %c0_i32, %c0_i32_0 : i32, i32
  }
  func.func @transform_3(%arg0: i32) -> (i32, i32) {
    %c0_i32 = arith.constant 0 : i32
    %c0_i32_0 = arith.constant 0 : i32
    %c0_i32_1 = arith.constant 0 : i32
    return %c0_i32, %c0_i32_0 : i32, i32
  }
  func.func @transform_4(%arg0: i32) -> (i32, i32) {
    %c0_i32 = arith.constant 0 : i32
    %c0_i32_0 = arith.constant 0 : i32
    %c0_i32_1 = arith.constant 0 : i32
    return %c0_i32, %c0_i32_0 : i32, i32
  }
  func.func @transform_5(%arg0: i32) -> (i32, i32) {
    %c0_i32 = arith.constant 0 : i32
    %c0_i32_0 = arith.constant 0 : i32
    %c0_i32_1 = arith.constant 0 : i32
    return %c0_i32, %c0_i32_0 : i32, i32
  }
  func.func @transform_6(%arg0: i32) -> (i32, i32) {
    %c0_i32 = arith.constant 0 : i32
    %c0_i32_0 = arith.constant 0 : i32
    %c0_i32_1 = arith.constant 0 : i32
    return %c0_i32, %c0_i32_0 : i32, i32
  }
  func.func @transform_7(%arg0: i32) -> (i32, i32) {
    %c0_i32 = arith.constant 0 : i32
    %c0_i32_0 = arith.constant 0 : i32
    %c0_i32_1 = arith.constant 0 : i32
    return %c0_i32, %c0_i32_0 : i32, i32
  }
  func.func @transform_8(%arg0: i32) -> (i32, i32) {
    %c0_i32 = arith.constant 0 : i32
    %c0_i32_0 = arith.constant 0 : i32
    %c0_i32_1 = arith.constant 0 : i32
    return %c0_i32, %c0_i32_0 : i32, i32
  }
  func.func @transform_9(%arg0: i32) -> (i32, i32) {
    %c0_i32 = arith.constant 0 : i32
    %c0_i32_0 = arith.constant 0 : i32
    %c0_i32_1 = arith.constant 0 : i32
    return %c0_i32, %c0_i32_0 : i32, i32
  }
  func.func @transform_10(%arg0: i32) -> (i32, i32) {
    %c0_i32 = arith.constant 0 : i32
    %c0_i32_0 = arith.constant 0 : i32
    %c0_i32_1 = arith.constant 0 : i32
    return %c0_i32, %c0_i32_0 : i32, i32
  }
  func.func @transform_11(%arg0: i32) -> (i32, i32) {
    %c0_i32 = arith.constant 0 : i32
    %c0_i32_0 = arith.constant 0 : i32
    %c0_i32_1 = arith.constant 0 : i32
    return %c0_i32, %c0_i32_0 : i32, i32
  }
  func.func @transform_12(%arg0: i32) -> (i32, i32) {
    %c0_i32 = arith.constant 0 : i32
    %c0_i32_0 = arith.constant 0 : i32
    %c0_i32_1 = arith.constant 0 : i32
    return %c0_i32, %c0_i32_0 : i32, i32
  }
  func.func @transform_13(%arg0: i32) -> (i32, i32) {
    %c0_i32 = arith.constant 0 : i32
    %c0_i32_0 = arith.constant 0 : i32
    %c0_i32_1 = arith.constant 0 : i32
    return %c0_i32, %c0_i32_0 : i32, i32
  }
}

module attributes {stable_mosaic.version = 11 : i64} {
  func.func @_fused_mlp_kernel(%arg0: i32, %arg1: memref<1x128xi32, #tpu.memory_space<vmem>>, %arg2: memref<128x8xf32, #tpu.memory_space<vmem>>, %arg3: memref<8x1xf32, #tpu.memory_space<vmem>>, %arg4: memref<8x128xbf16, #tpu.memory_space<vmem>>, %arg5: memref<1x128xf32, #tpu.memory_space<vmem>>, %arg6: memref<128x128xbf16, #tpu.memory_space<vmem>>, %arg7: memref<1x128xf32, #tpu.memory_space<vmem>>, %arg8: memref<128x128xbf16, #tpu.memory_space<vmem>>, %arg9: memref<1x128xf32, #tpu.memory_space<vmem>>, %arg10: memref<128x128xbf16, #tpu.memory_space<vmem>>, %arg11: memref<1x128xf32, #tpu.memory_space<vmem>>, %arg12: memref<128x128xbf16, #tpu.memory_space<vmem>>, %arg13: memref<1x128xf32, #tpu.memory_space<vmem>>, %arg14: memref<8x128xf32, #tpu.memory_space<vmem>>, %arg15: memref<8x128xf32, #tpu.memory_space<vmem>>) attributes {dimension_semantics = [#tpu.dimension_semantics<arbitrary>], iteration_bounds = array<i64: 1>, scalar_prefetch = 0 : i64, scratch_operands = 1 : i64, tpu.core_type = #tpu.core_type<tc>, window_params = [{transform_indices = @transform_0, window_bounds = array<i64: 1, 128>}, {transform_indices = @transform_1, window_bounds = array<i64: 128, 8>}, {pipeline_mode = #tpu.pipeline_mode<synchronous>, transform_indices = @transform_2, window_bounds = array<i64: 8, 1>}, {pipeline_mode = #tpu.pipeline_mode<synchronous>, transform_indices = @transform_3, window_bounds = array<i64: 8, 128>}, {pipeline_mode = #tpu.pipeline_mode<synchronous>, transform_indices = @transform_4, window_bounds = array<i64: 1, 128>}, {pipeline_mode = #tpu.pipeline_mode<synchronous>, transform_indices = @transform_5, window_bounds = array<i64: 128, 128>}, {pipeline_mode = #tpu.pipeline_mode<synchronous>, transform_indices = @transform_6, window_bounds = array<i64: 1, 128>}, {pipeline_mode = #tpu.pipeline_mode<synchronous>, transform_indices = @transform_7, window_bounds = array<i64: 128, 128>}, {pipeline_mode = #tpu.pipeline_mode<synchronous>, transform_indices = @transform_8, window_bounds = array<i64: 1, 128>}, {pipeline_mode = #tpu.pipeline_mode<synchronous>, transform_indices = @transform_9, window_bounds = array<i64: 128, 128>}, {pipeline_mode = #tpu.pipeline_mode<synchronous>, transform_indices = @transform_10, window_bounds = array<i64: 1, 128>}, {pipeline_mode = #tpu.pipeline_mode<synchronous>, transform_indices = @transform_11, window_bounds = array<i64: 128, 128>}, {pipeline_mode = #tpu.pipeline_mode<synchronous>, transform_indices = @transform_12, window_bounds = array<i64: 1, 128>}, {pipeline_mode = #tpu.pipeline_mode<synchronous>, transform_indices = @transform_13, window_bounds = array<i64: 8, 128>}]} {
    %c0_i32 = arith.constant 0 : i32
    %0 = arith.cmpi eq, %arg0, %c0_i32 : i32
    %1 = arith.extui %0 : i1 to i32
    %c0_i32_0 = arith.constant 0 : i32
    %2 = arith.cmpi ne, %1, %c0_i32_0 : i32
    scf.if %2 {
      %cst_26 = arith.constant 0.000000e+00 : f32
      %39 = vector.broadcast %cst_26 : f32 to vector<8x128xf32>
      %c0_27 = arith.constant 0 : index
      %c0_28 = arith.constant 0 : index
      %40 = vector.load %arg15[%c0_27, %c0_28] : memref<8x128xf32, #tpu.memory_space<vmem>>, vector<8x128xf32>
      tpu.vector_store %arg15[%c0_27, %c0_28], %39 {strides = array<i32>} : memref<8x128xf32, #tpu.memory_space<vmem>>, vector<8x128xf32>,
    } else {
    }
    %c0 = arith.constant 0 : index
    %c0_1 = arith.constant 0 : index
    %3 = vector.load %arg2[%c0, %c0_1] : memref<128x8xf32, #tpu.memory_space<vmem>>, vector<128x8xf32>
    %4 = arith.truncf %3 : vector<128x8xf32> to vector<128x8xbf16>
    %c0_2 = arith.constant 0 : index
    %c0_3 = arith.constant 0 : index
    %5 = vector.load %arg4[%c0_2, %c0_3] : memref<8x128xbf16, #tpu.memory_space<vmem>>, vector<8x128xbf16>
    %cst = arith.constant dense<0.000000e+00> : vector<128x128xf32>
    %6 = tpu.matmul %4, %5, %cst {dimension_numbers = #tpu.dot_dimension_numbers<[1], [0], [0], [1], [0, 0, 1, 1], [], []>} : vector<128x8xbf16>, vector<8x128xbf16>, vector<128x128xf32> -> vector<128x128xf32>
    %c0_4 = arith.constant 0 : index
    %c0_5 = arith.constant 0 : index
    %7 = vector.load %arg5[%c0_4, %c0_5] : memref<1x128xf32, #tpu.memory_space<vmem>>, vector<1x128xf32>
    %8 = vector.broadcast %7 : vector<1x128xf32> to vector<128x128xf32>
    %9 = arith.addf %6, %8 : vector<128x128xf32>
    %10 = arith.truncf %9 : vector<128x128xf32> to vector<128x128xbf16>
    %c0_6 = arith.constant 0 : index
    %c0_7 = arith.constant 0 : index
    %11 = vector.load %arg6[%c0_6, %c0_7] : memref<128x128xbf16, #tpu.memory_space<vmem>>, vector<128x128xbf16>
    %cst_8 = arith.constant dense<0.000000e+00> : vector<128x128xf32>
    %12 = tpu.matmul %10, %11, %cst_8 {dimension_numbers = #tpu.dot_dimension_numbers<[1], [0], [0], [1], [0, 0, 1, 1], [], []>} : vector<128x128xbf16>, vector<128x128xbf16>, vector<128x128xf32> -> vector<128x128xf32>
    %c0_9 = arith.constant 0 : index
    %c0_10 = arith.constant 0 : index
    %13 = vector.load %arg7[%c0_9, %c0_10] : memref<1x128xf32, #tpu.memory_space<vmem>>, vector<1x128xf32>
    %14 = vector.broadcast %13 : vector<1x128xf32> to vector<128x128xf32>
    %15 = arith.addf %12, %14 : vector<128x128xf32>
    %cst_11 = arith.constant 0.000000e+00 : f32
    %16 = vector.broadcast %cst_11 : f32 to vector<128x128xf32>
    %17 = arith.maximumf %15, %16 : vector<128x128xf32>
    %18 = arith.truncf %17 : vector<128x128xf32> to vector<128x128xbf16>
    %c0_12 = arith.constant 0 : index
    %c0_13 = arith.constant 0 : index
    %19 = vector.load %arg8[%c0_12, %c0_13] : memref<128x128xbf16, #tpu.memory_space<vmem>>, vector<128x128xbf16>
    %cst_14 = arith.constant dense<0.000000e+00> : vector<128x128xf32>
    %20 = tpu.matmul %18, %19, %cst_14 {dimension_numbers = #tpu.dot_dimension_numbers<[1], [0], [0], [1], [0, 0, 1, 1], [], []>} : vector<128x128xbf16>, vector<128x128xbf16>, vector<128x128xf32> -> vector<128x128xf32>
    %c0_15 = arith.constant 0 : index
    %c0_16 = arith.constant 0 : index
    %21 = vector.load %arg9[%c0_15, %c0_16] : memref<1x128xf32, #tpu.memory_space<vmem>>, vector<1x128xf32>
    %22 = vector.broadcast %21 : vector<1x128xf32> to vector<128x128xf32>
    %23 = arith.addf %20, %22 : vector<128x128xf32>
    %c0_17 = arith.constant 0 : index
    %c0_18 = arith.constant 0 : index
    %24 = vector.load %arg1[%c0_17, %c0_18] : memref<1x128xi32, #tpu.memory_space<vmem>>, vector<1x128xi32>
    %25 = tpu.iota {dimensions = array<i32: 0>} : vector<8x128xi32>
    %26 = vector.broadcast %24 : vector<1x128xi32> to vector<8x128xi32>
    %27 = arith.cmpi eq, %25, %26 : vector<8x128xi32>
    %28 = arith.extui %27 : vector<8x128xi1> to vector<8x128xi32>
    %29 = arith.sitofp %28 : vector<8x128xi32> to vector<8x128xf32>
    %30 = arith.truncf %29 : vector<8x128xf32> to vector<8x128xbf16>
    %c0_19 = arith.constant 0 : index
    %c0_20 = arith.constant 0 : index
    %31 = vector.load %arg15[%c0_19, %c0_20] : memref<8x128xf32, #tpu.memory_space<vmem>>, vector<8x128xf32>
    %32 = arith.truncf %23 : vector<128x128xf32> to vector<128x128xbf16>
    %cst_21 = arith.constant dense<0.000000e+00> : vector<8x128xf32>
    %33 = tpu.matmul %30, %32, %cst_21 {dimension_numbers = #tpu.dot_dimension_numbers<[1], [0], [0], [1], [0, 0, 1, 1], [], []>} : vector<8x128xbf16>, vector<128x128xbf16>, vector<8x128xf32> -> vector<8x128xf32>
    %34 = arith.addf %31, %33 : vector<8x128xf32>
    %c0_22 = arith.constant 0 : index
    %c0_23 = arith.constant 0 : index
    %35 = vector.load %arg15[%c0_22, %c0_23] : memref<8x128xf32, #tpu.memory_space<vmem>>, vector<8x128xf32>
    tpu.vector_store %arg15[%c0_22, %c0_23], %34 {strides = array<i32>} : memref<8x128xf32, #tpu.memory_space<vmem>>, vector<8x128xf32>,
    %c0_i32_24 = arith.constant 0 : i32
    %36 = arith.cmpi eq, %arg0, %c0_i32_24 : i32
    %37 = arith.extui %36 : i1 to i32
    %c0_i32_25 = arith.constant 0 : i32
    %38 = arith.cmpi ne, %37, %c0_i32_25 : i32
    scf.if %38 {
      %c0_26 = arith.constant 0 : index
      %c0_27 = arith.constant 0 : index
      %39 = vector.load %arg15[%c0_26, %c0_27] : memref<8x128xf32, #tpu.memory_space<vmem>>, vector<8x128xf32>
      %c0_28 = arith.constant 0 : index
      %c0_29 = arith.constant 0 : index
      %40 = vector.load %arg3[%c0_28, %c0_29] : memref<8x1xf32, #tpu.memory_space<vmem>>, vector<8x1xf32>
      %cst_30 = arith.constant 1.000000e+00 : f32
      %41 = vector.broadcast %cst_30 : f32 to vector<8x1xf32>
      %42 = arith.maximumf %40, %41 : vector<8x1xf32>
      %43 = vector.broadcast %42 : vector<8x1xf32> to vector<8x128xf32>
      %44 = arith.divf %39, %43 : vector<8x128xf32>
      %45 = arith.truncf %44 : vector<8x128xf32> to vector<8x128xbf16>
      %c0_31 = arith.constant 0 : index
      %c0_32 = arith.constant 0 : index
      %46 = vector.load %arg10[%c0_31, %c0_32] : memref<128x128xbf16, #tpu.memory_space<vmem>>, vector<128x128xbf16>
      %cst_33 = arith.constant dense<0.000000e+00> : vector<8x128xf32>
      %47 = tpu.matmul %45, %46, %cst_33 {dimension_numbers = #tpu.dot_dimension_numbers<[1], [0], [0], [1], [0, 0, 1, 1], [], []>} : vector<8x128xbf16>, vector<128x128xbf16>, vector<8x128xf32> -> vector<8x128xf32>
      %c0_34 = arith.constant 0 : index
      %c0_35 = arith.constant 0 : index
      %48 = vector.load %arg11[%c0_34, %c0_35] : memref<1x128xf32, #tpu.memory_space<vmem>>, vector<1x128xf32>
      %49 = vector.broadcast %48 : vector<1x128xf32> to vector<8x128xf32>
      %50 = arith.addf %47, %49 : vector<8x128xf32>
      %cst_36 = arith.constant 0.000000e+00 : f32
      %51 = vector.broadcast %cst_36 : f32 to vector<8x128xf32>
      %52 = arith.maximumf %50, %51 : vector<8x128xf32>
      %53 = arith.truncf %52 : vector<8x128xf32> to vector<8x128xbf16>
      %c0_37 = arith.constant 0 : index
      %c0_38 = arith.constant 0 : index
      %54 = vector.load %arg12[%c0_37, %c0_38] : memref<128x128xbf16, #tpu.memory_space<vmem>>, vector<128x128xbf16>
      %cst_39 = arith.constant dense<0.000000e+00> : vector<8x128xf32>
      %55 = tpu.matmul %53, %54, %cst_39 {dimension_numbers = #tpu.dot_dimension_numbers<[1], [0], [0], [1], [0, 0, 1, 1], [], []>} : vector<8x128xbf16>, vector<128x128xbf16>, vector<8x128xf32> -> vector<8x128xf32>
      %c0_40 = arith.constant 0 : index
      %c0_41 = arith.constant 0 : index
      %56 = vector.load %arg13[%c0_40, %c0_41] : memref<1x128xf32, #tpu.memory_space<vmem>>, vector<1x128xf32>
      %57 = vector.broadcast %56 : vector<1x128xf32> to vector<8x128xf32>
      %58 = arith.addf %55, %57 : vector<8x128xf32>
      %c0_42 = arith.constant 0 : index
      %c0_43 = arith.constant 0 : index
      %59 = vector.load %arg14[%c0_42, %c0_43] : memref<8x128xf32, #tpu.memory_space<vmem>>, vector<8x128xf32>
      tpu.vector_store %arg14[%c0_42, %c0_43], %58 {strides = array<i32>} : memref<8x128xf32, #tpu.memory_space<vmem>>, vector<8x128xf32>,
    } else {
    }
    return
  }
  func.func @transform_0(%arg0: i32) -> (i32, i32) {
    %c0_i32 = arith.constant 0 : i32
    %c0_i32_0 = arith.constant 0 : i32
    return %c0_i32, %arg0 : i32, i32
  }
  func.func @transform_1(%arg0: i32) -> (i32, i32) {
    %c0_i32 = arith.constant 0 : i32
    %c0_i32_0 = arith.constant 0 : i32
    return %arg0, %c0_i32 : i32, i32
  }
  func.func @transform_2(%arg0: i32) -> (i32, i32) {
    %c0_i32 = arith.constant 0 : i32
    %c0_i32_0 = arith.constant 0 : i32
    %c0_i32_1 = arith.constant 0 : i32
    return %c0_i32, %c0_i32_0 : i32, i32
  }
  func.func @transform_3(%arg0: i32) -> (i32, i32) {
    %c0_i32 = arith.constant 0 : i32
    %c0_i32_0 = arith.constant 0 : i32
    %c0_i32_1 = arith.constant 0 : i32
    return %c0_i32, %c0_i32_0 : i32, i32
  }
  func.func @transform_4(%arg0: i32) -> (i32, i32) {
    %c0_i32 = arith.constant 0 : i32
    %c0_i32_0 = arith.constant 0 : i32
    %c0_i32_1 = arith.constant 0 : i32
    return %c0_i32, %c0_i32_0 : i32, i32
  }
  func.func @transform_5(%arg0: i32) -> (i32, i32) {
    %c0_i32 = arith.constant 0 : i32
    %c0_i32_0 = arith.constant 0 : i32
    %c0_i32_1 = arith.constant 0 : i32
    return %c0_i32, %c0_i32_0 : i32, i32
  }
  func.func @transform_6(%arg0: i32) -> (i32, i32) {
    %c0_i32 = arith.constant 0 : i32
    %c0_i32_0 = arith.constant 0 : i32
    %c0_i32_1 = arith.constant 0 : i32
    return %c0_i32, %c0_i32_0 : i32, i32
  }
  func.func @transform_7(%arg0: i32) -> (i32, i32) {
    %c0_i32 = arith.constant 0 : i32
    %c0_i32_0 = arith.constant 0 : i32
    %c0_i32_1 = arith.constant 0 : i32
    return %c0_i32, %c0_i32_0 : i32, i32
  }
  func.func @transform_8(%arg0: i32) -> (i32, i32) {
    %c0_i32 = arith.constant 0 : i32
    %c0_i32_0 = arith.constant 0 : i32
    %c0_i32_1 = arith.constant 0 : i32
    return %c0_i32, %c0_i32_0 : i32, i32
  }
  func.func @transform_9(%arg0: i32) -> (i32, i32) {
    %c0_i32 = arith.constant 0 : i32
    %c0_i32_0 = arith.constant 0 : i32
    %c0_i32_1 = arith.constant 0 : i32
    return %c0_i32, %c0_i32_0 : i32, i32
  }
  func.func @transform_10(%arg0: i32) -> (i32, i32) {
    %c0_i32 = arith.constant 0 : i32
    %c0_i32_0 = arith.constant 0 : i32
    %c0_i32_1 = arith.constant 0 : i32
    return %c0_i32, %c0_i32_0 : i32, i32
  }
  func.func @transform_11(%arg0: i32) -> (i32, i32) {
    %c0_i32 = arith.constant 0 : i32
    %c0_i32_0 = arith.constant 0 : i32
    %c0_i32_1 = arith.constant 0 : i32
    return %c0_i32, %c0_i32_0 : i32, i32
  }
  func.func @transform_12(%arg0: i32) -> (i32, i32) {
    %c0_i32 = arith.constant 0 : i32
    %c0_i32_0 = arith.constant 0 : i32
    %c0_i32_1 = arith.constant 0 : i32
    return %c0_i32, %c0_i32_0 : i32, i32
  }
  func.func @transform_13(%arg0: i32) -> (i32, i32) {
    %c0_i32 = arith.constant 0 : i32
    %c0_i32_0 = arith.constant 0 : i32
    %c0_i32_1 = arith.constant 0 : i32
    return %c0_i32, %c0_i32_0 : i32, i32
  }
}

</mosaic_0001>

<llo_original>
// kernel: tpu_custom_call.1
$region0: #{tpu_custom_call.1}
  #allocation0 [shape = 'u32[]', space=smem, size = 0x4, offset = 0x4, fixed_abs, tag = 'smem constant byte address 0x4 - core index']
  #allocation1 [shape = 'u32[144,128]{1,0:T(1,128)}', space=vmem, size = 0x12000, scoped, tag = 'internal scratch']
  #allocation2 [shape = 'f32[8,128]{1,0:T(8,128)}', space=vmem, size = 0x1000, scoped, tag = 'scratch operand']
  %s0 = inlined_call_operand.vmem [shape: s32[1,128], index: 0, kind: input, shape index: {}]
  %s1 = inlined_call_operand.vmem [shape: f32[128,8], index: 1, kind: input, shape index: {}]
  %s2 = inlined_call_operand.vmem [shape: f32[8,1], index: 2, kind: input, shape index: {}]
  %s3 = inlined_call_operand.vmem [shape: bf16[8,128], index: 3, kind: input, shape index: {}]
  %s4 = inlined_call_operand.vmem [shape: f32[1,128], index: 4, kind: input, shape index: {}]
  %s5 = inlined_call_operand.vmem [shape: bf16[128,128], index: 5, kind: input, shape index: {}]
  %s6 = inlined_call_operand.vmem [shape: f32[1,128], index: 6, kind: input, shape index: {}]
  %s7 = inlined_call_operand.vmem [shape: bf16[128,128], index: 7, kind: input, shape index: {}]
  %s8 = inlined_call_operand.vmem [shape: f32[1,128], index: 8, kind: input, shape index: {}]
  %s9 = inlined_call_operand.hbm [shape: bf16[128,128], index: 9, kind: input, shape index: {}]
  %s10 = inlined_call_operand.vmem [shape: f32[1,128], index: 10, kind: input, shape index: {}]
  %s11 = inlined_call_operand.hbm [shape: bf16[128,128], index: 11, kind: input, shape index: {}]
  %s12 = inlined_call_operand.vmem [shape: f32[1,128], index: 12, kind: input, shape index: {}]
  %s13 = inlined_call_operand.hbm [shape: f32[8,128], index: 13, kind: output, shape index: {}]
  %s14 = sld [smem:[#allocation0]]
  $region78: #{tpu_custom_call.1} parent=0
    _
  %s16 = ssub.s32 1, %s14
  %s17 = scalar_select 0, %s16, %s14
  $region1: #{tpu_custom_call.1} parent=0
    #allocation3 [shape = 'u8[32768]{0}', space=vmem, size = 0x8000, scoped, tag = 'input window, operand 9, single buffered']
    #allocation4 [shape = 's32[1]{0}', space=sflag, size = 0x4, scoped, tag = 'scoped memory for tpu_custom_call.1']
    #allocation5 [shape = 's32[1]{0}', space=sflag, size = 0x4, scoped, tag = 'scoped memory for tpu_custom_call.1']
    #allocation6 [shape = 'u8[32768]{0}', space=vmem, size = 0x8000, scoped, tag = 'input window, operand 11, single buffered']
    #allocation7 [shape = 's32[1]{0}', space=sflag, size = 0x4, scoped, tag = 'scoped memory for tpu_custom_call.1']
    #allocation8 [shape = 'u8[4096]{0}', space=vmem, size = 0x1000, scoped, tag = 'output window, operand 0, single buffered']
    %18 = vsyncpa [#allocation4], 0
    %19 = vsyncpa [#allocation7], 0
    %20 = vsyncpa [#allocation5], 0
    // Predicated region
    $region2: #{tpu_custom_call.1} parent=1 // pred_check
      _
    $region3: #{tpu_custom_call.1} parent=1 // pred_check_branch
      %22 = sbr.rel (0) target = $region5
    $region4: #{tpu_custom_call.1} parent=1 // pred_region
      _
    $region5: #{tpu_custom_call.1} parent=1 // pred_fallthru
      _
    // Predicated region
    $region6: #{tpu_custom_call.1} parent=1 // pred_check
      _
    $region7: #{tpu_custom_call.1} parent=1 // pred_check_branch
      %24 = sbr.rel (0) target = $region9
    $region8: #{tpu_custom_call.1} parent=1 // pred_region
      _
    $region9: #{tpu_custom_call.1} parent=1 // pred_fallthru
      _
    // Predicated region
    $region10: #{tpu_custom_call.1} parent=1 // pred_check
      _
    $region11: #{tpu_custom_call.1} parent=1 // pred_check_branch
      %26 = sbr.rel (0) target = $region13
    $region12: #{tpu_custom_call.1} parent=1 // pred_region
      _
    $region13: #{tpu_custom_call.1} parent=1 // pred_fallthru
      _
    // Predicated region
    $region14: #{tpu_custom_call.1} parent=1 // pred_check
      _
    $region15: #{tpu_custom_call.1} parent=1 // pred_check_branch
      %28 = sbr.rel (0) target = $region17
    $region16: #{tpu_custom_call.1} parent=1 // pred_region
      _
    $region17: #{tpu_custom_call.1} parent=1 // pred_fallthru
      _
    // Predicated region
    $region18: #{tpu_custom_call.1} parent=1 // pred_check
      _
    $region19: #{tpu_custom_call.1} parent=1 // pred_check_branch
      %30 = sbr.rel (0) target = $region21
    $region20: #{tpu_custom_call.1} parent=1 // pred_region
      _
    $region21: #{tpu_custom_call.1} parent=1 // pred_fallthru
      _
    // Predicated region
    $region22: #{tpu_custom_call.1} parent=1 // pred_check
      _
    $region23: #{tpu_custom_call.1} parent=1 // pred_check_branch
      %32 = sbr.rel (0) target = $region25
    $region24: #{tpu_custom_call.1} parent=1 // pred_region
      _
    $region25: #{tpu_custom_call.1} parent=1 // pred_fallthru
      _
    // Predicated region
    $region26: #{tpu_custom_call.1} parent=1 // pred_check
      _
    $region27: #{tpu_custom_call.1} parent=1 // pred_check_branch
      %34 = sbr.rel (0) target = $region29
    $region28: #{tpu_custom_call.1} parent=1 // pred_region
      _
    $region29: #{tpu_custom_call.1} parent=1 // pred_fallthru
      _
    // Predicated region
    $region30: #{tpu_custom_call.1} parent=1 // pred_check
      _
    $region31: #{tpu_custom_call.1} parent=1 // pred_check_branch
      %36 = sbr.rel (0) target = $region33
    $region32: #{tpu_custom_call.1} parent=1 // pred_region
      _
    $region33: #{tpu_custom_call.1} parent=1 // pred_fallthru
      _
    // Predicated region
    $region34: #{tpu_custom_call.1} parent=1 // pred_check
      _
    $region35: #{tpu_custom_call.1} parent=1 // pred_check_branch
      %38 = sbr.rel (0) target = $region37
    $region36: #{tpu_custom_call.1} parent=1 // pred_region
      _
    $region37: #{tpu_custom_call.1} parent=1 // pred_fallthru
      _
    // Predicated region
    $region38: #{tpu_custom_call.1} parent=1 // pred_check
      _
    $region39: #{tpu_custom_call.1} parent=1 // pred_check_branch
      %40 = sbr.rel (0) target = $region41
    $region40: #{tpu_custom_call.1} parent=1 // pred_region
      %s42 = ssub.s32 1024, 1024
      %43 = vsyncadd [#allocation4], %s42
      %s44 = sshll.u32 [#allocation3], 4
      %s45 = int_to_ptr.vmem [resolvable:$true] %s44
      %50 = dma.hbm_to_vmem [thread:$0]  %s9, 1024, %s45, [#allocation4], 64, 64, 4
    $region41: #{tpu_custom_call.1} parent=1 // pred_fallthru
      _
    // Predicated region
    $region42: #{tpu_custom_call.1} parent=1 // pred_check
      _
    $region43: #{tpu_custom_call.1} parent=1 // pred_check_branch
      %52 = sbr.rel (0) target = $region45
    $region44: #{tpu_custom_call.1} parent=1 // pred_region
      _
    $region45: #{tpu_custom_call.1} parent=1 // pred_fallthru
      _
    // Predicated region
    $region46: #{tpu_custom_call.1} parent=1 // pred_check
      _
    $region47: #{tpu_custom_call.1} parent=1 // pred_check_branch
      %54 = sbr.rel (0) target = $region49
    $region48: #{tpu_custom_call.1} parent=1 // pred_region
      %s56 = ssub.s32 1024, 1024
      %57 = vsyncadd [#allocation7], %s56
      %s58 = sshll.u32 [#allocation6], 4
      %s59 = int_to_ptr.vmem [resolvable:$true] %s58
      %64 = dma.hbm_to_vmem [thread:$0]  %s11, 1024, %s59, [#allocation7], 64, 64, 4
    $region49: #{tpu_custom_call.1} parent=1 // pred_fallthru
      _
    // Predicated region
    $region50: #{tpu_custom_call.1} parent=1 // pred_check
      _
    $region51: #{tpu_custom_call.1} parent=1 // pred_check_branch
      %66 = sbr.rel (0) target = $region53
    $region52: #{tpu_custom_call.1} parent=1 // pred_region
      _
    $region53: #{tpu_custom_call.1} parent=1 // pred_fallthru
      _
    // Predicated region
    $region54: #{tpu_custom_call.1} parent=1 // pred_check
      _
    $region55: #{tpu_custom_call.1} parent=1 // pred_check_branch
      %68 = sbr.rel (0) target = $region57
    $region56: #{tpu_custom_call.1} parent=1 // pred_region
      %69 = dma.done [#allocation4], 1024
    $region57: #{tpu_custom_call.1} parent=1 // pred_fallthru
      _
    // Predicated region
    $region58: #{tpu_custom_call.1} parent=1 // pred_check
      _
    $region59: #{tpu_custom_call.1} parent=1 // pred_check_branch
      %71 = sbr.rel (0) target = $region61
    $region60: #{tpu_custom_call.1} parent=1 // pred_region
      %72 = dma.done [#allocation7], 1024
    $region61: #{tpu_custom_call.1} parent=1 // pred_fallthru
      _
    %p74 = scmp.eq.s32.totalorder 0, 0
    // Predicated region
    $region62: #{tpu_custom_call.1} parent=1 // pred_check
      %p75 = pneg %p74
    $region63: #{tpu_custom_call.1} parent=1 // pred_check_branch
      %77 = sbr.rel (%p75) target = $region65
    $region64: #{tpu_custom_call.1} parent=1 // pred_region
      %78 = vst [vmem:[#allocation2] sm:$0xff] 0.0
    $region65: #{tpu_custom_call.1} parent=1 // pred_fallthru
      _
    %v79 = vld [vmem:[%s1] sm:$0xff]
    %v80 = vld [vmem:[%s1 + $0x8] sm:$0xff]
    %v81 = vld [vmem:[%s1 + $0x10] sm:$0xff]
    %v82 = vld [vmem:[%s1 + $0x18] sm:$0xff]
    %v83 = vld [vmem:[%s1 + $0x20] sm:$0xff]
    %v84 = vld [vmem:[%s1 + $0x28] sm:$0xff]
    %v85 = vld [vmem:[%s1 + $0x30] sm:$0xff]
    %v86 = vld [vmem:[%s1 + $0x38] sm:$0xff]
    %v87 = vld [vmem:[%s1 + $0x40] sm:$0xff]
    %v88 = vld [vmem:[%s1 + $0x48] sm:$0xff]
    %v89 = vld [vmem:[%s1 + $0x50] sm:$0xff]
    %v90 = vld [vmem:[%s1 + $0x58] sm:$0xff]
    %v91 = vld [vmem:[%s1 + $0x60] sm:$0xff]
    %v92 = vld [vmem:[%s1 + $0x68] sm:$0xff]
    %v93 = vld [vmem:[%s1 + $0x70] sm:$0xff]
    %v94 = vld [vmem:[%s1 + $0x78] sm:$0xff]
    %v95 = vpack.c.bf16 %v80, %v79
    %v96 = vpack.c.bf16 %v82, %v81
    %v97 = vpack.c.bf16 %v84, %v83
    %v98 = vpack.c.bf16 %v86, %v85
    %v99 = vpack.c.bf16 %v88, %v87
    %v100 = vpack.c.bf16 %v90, %v89
    %v101 = vpack.c.bf16 %v92, %v91
    %v102 = vpack.c.bf16 %v94, %v93
    %v103 = vld [vmem:[%s3] sm:$0xf]
    %v104 = vld [vmem:[%s4] sm:$0x1]
    %v106 = vlaneseq
    %v107 = vshrl.u32 %v106, 7
    %v108 = vsub.s32 0, %v107
    %v109 = vrot.slane %v104, %v108
    %vm111 = vcmask 64512
    %v113 = vsel %vm111, %v95, 0
    %v116 = vsel %vm111, %v96, 0
    %v119 = vsel %vm111, %v97, 0
    %v122 = vsel %vm111, %v98, 0
    %v125 = vsel %vm111, %v99, 0
    %v128 = vsel %vm111, %v100, 0
    %v131 = vsel %vm111, %v101, 0
    %v134 = vsel %vm111, %v102, 0
    %vm136 = vcmask 1043456
    %v138 = vsel %vm136, %v103, 0
    %140 = vmatprep.subr.bf16.mxu0 0
    %141 = vmatpush1.bf16.msra.mxu0 %v138
    %142 = vmatprep.subr.bf16.mxu0 0
    %143 = vmatpush1.bf16.msra.mxu0 0
    %144 = vmatprep.subr.bf16.mxu0 0
    %145 = vmatpush1.bf16.msra.mxu0 0
    %146 = vmatprep.subr.bf16.mxu0 0
    %147 = vmatpush1.bf16.msra.mxu0 0
    %148 = vmatprep.subr.bf16.mxu0 0
    %149 = vmatpush1.bf16.msra.mxu0 0
    %150 = vmatprep.subr.bf16.mxu0 0
    %151 = vmatpush1.bf16.msra.mxu0 0
    %152 = vmatprep.subr.bf16.mxu0 0
    %153 = vmatpush1.bf16.msra.mxu0 0
    %154 = vmatprep.subr.bf16.mxu0 0
    %155 = vmatpush1.bf16.msra.mxu0 0
    %156 = vmatprep.subr.bf16.mxu0 0
    %157 = vmatpush1.bf16.msra.mxu0 0
    %158 = vmatprep.subr.bf16.mxu0 0
    %159 = vmatpush1.bf16.msra.mxu0 0
    %160 = vmatprep.subr.bf16.mxu0 0
    %161 = vmatpush1.bf16.msra.mxu0 0
    %162 = vmatprep.subr.bf16.mxu0 0
    %163 = vmatpush1.bf16.msra.mxu0 0
    %164 = vmatprep.subr.bf16.mxu0 0
    %165 = vmatpush1.bf16.msra.mxu0 0
    %166 = vmatprep.subr.bf16.mxu0 0
    %167 = vmatpush1.bf16.msra.mxu0 0
    %168 = vmatprep.subr.bf16.mxu0 0
    %169 = vmatpush1.bf16.msra.mxu0 0
    %170 = vmatprep.subr.bf16.mxu0 0
    %171 = vmatpush1.bf16.msra.mxu0 0
    %172 = vmatprep.mubr.bf16.mxu0 0
    %173 = vmatmul.mubr.bf16.gmra.mrb[0].mxu0 %v113
    %v174 = vpop.f32.mrb[0].mxu0
    %v175 = vadd.f32 %v109, %v174
    %v176 = vpop.f32.mrb[0].mxu0
    %v177 = vpop.f32.mrb[0].mxu0
    %v178 = vadd.f32 %v109, %v177
    %v179 = vpop.f32.mrb[0].mxu0
    %180 = vmatprep.mubr.bf16.mxu0 0
    %181 = vmatmul.mubr.bf16.gmra.mrb[0].mxu0 %v116
    %v182 = vpop.f32.mrb[0].mxu0
    %v183 = vadd.f32 %v109, %v182
    %v184 = vpop.f32.mrb[0].mxu0
    %v185 = vpop.f32.mrb[0].mxu0
    %v186 = vadd.f32 %v109, %v185
    %v187 = vpop.f32.mrb[0].mxu0
    %188 = vmatprep.mubr.bf16.mxu0 0
    %189 = vmatmul.mubr.bf16.gmra.mrb[0].mxu0 %v119
    %v190 = vpop.f32.mrb[0].mxu0
    %v191 = vadd.f32 %v109, %v190
    %v192 = vpop.f32.mrb[0].mxu0
    %v193 = vpop.f32.mrb[0].mxu0
    %v194 = vadd.f32 %v109, %v193
    %v195 = vpop.f32.mrb[0].mxu0
    %196 = vmatprep.mubr.bf16.mxu0 0
    %197 = vmatmul.mubr.bf16.gmra.mrb[0].mxu0 %v122
    %v198 = vpop.f32.mrb[0].mxu0
    %v199 = vadd.f32 %v109, %v198
    %v200 = vpop.f32.mrb[0].mxu0
    %v201 = vpop.f32.mrb[0].mxu0
    %v202 = vadd.f32 %v109, %v201
    %v203 = vpop.f32.mrb[0].mxu0
    %204 = vmatprep.mubr.bf16.mxu0 0
    %205 = vmatmul.mubr.bf16.gmra.mrb[0].mxu0 %v125
    %v206 = vpop.f32.mrb[0].mxu0
    %v207 = vadd.f32 %v109, %v206
    %v208 = vpop.f32.mrb[0].mxu0
    %v209 = vpop.f32.mrb[0].mxu0
    %v210 = vadd.f32 %v109, %v209
    %v211 = vpop.f32.mrb[0].mxu0
    %212 = vmatprep.mubr.bf16.mxu0 0
    %213 = vmatmul.mubr.bf16.gmra.mrb[0].mxu0 %v128
    %v214 = vpop.f32.mrb[0].mxu0
    %v215 = vadd.f32 %v109, %v214
    %v216 = vpop.f32.mrb[0].mxu0
    %v217 = vpop.f32.mrb[0].mxu0
    %v218 = vadd.f32 %v109, %v217
    %v219 = vpop.f32.mrb[0].mxu0
    %220 = vmatprep.mubr.bf16.mxu0 0
    %221 = vmatmul.mubr.bf16.gmra.mrb[0].mxu0 %v131
    %v222 = vpop.f32.mrb[0].mxu0
    %v223 = vadd.f32 %v109, %v222
    %v224 = vpop.f32.mrb[0].mxu0
    %v225 = vpop.f32.mrb[0].mxu0
    %v226 = vadd.f32 %v109, %v225
    %v227 = vpop.f32.mrb[0].mxu0
    %228 = vmatprep.mubr.bf16.mxu0 0
    %229 = vmatmul.mubr.bf16.gmra.mrb[0].mxu0 %v134
    %v230 = vpop.f32.mrb[0].mxu0
    %v231 = vadd.f32 %v109, %v230
    %v232 = vpop.f32.mrb[0].mxu0
    %v233 = vpop.f32.mrb[0].mxu0
    %v234 = vadd.f32 %v109, %v233
    %v235 = vpop.f32.mrb[0].mxu0
    %236 = vdwg.mxu0
    %v237 = vpack.c.bf16 %v178, %v175
    %v238 = vpack.c.bf16 %v186, %v183
    %v239 = vpack.c.bf16 %v194, %v191
    %v240 = vpack.c.bf16 %v202, %v199
    %v241 = vpack.c.bf16 %v210, %v207
    %v242 = vpack.c.bf16 %v218, %v215
    %v243 = vpack.c.bf16 %v226, %v223
    %v244 = vpack.c.bf16 %v234, %v231
    %v245 = vld [vmem:[%s5] sm:$0xf]
    %v246 = vld [vmem:[%s5 + $0x4] sm:$0xf]
    %v247 = vld [vmem:[%s5 + $0x8] sm:$0xf]
    %v248 = vld [vmem:[%s5 + $0xc] sm:$0xf]
    %v249 = vld [vmem:[%s5 + $0x10] sm:$0xf]
    %v250 = vld [vmem:[%s5 + $0x14] sm:$0xf]
    %v251 = vld [vmem:[%s5 + $0x18] sm:$0xf]
    %v252 = vld [vmem:[%s5 + $0x1c] sm:$0xf]
    %v253 = vld [vmem:[%s5 + $0x20] sm:$0xf]
    %v254 = vld [vmem:[%s5 + $0x24] sm:$0xf]
    %v255 = vld [vmem:[%s5 + $0x28] sm:$0xf]
    %v256 = vld [vmem:[%s5 + $0x2c] sm:$0xf]
    %v257 = vld [vmem:[%s5 + $0x30] sm:$0xf]
    %v258 = vld [vmem:[%s5 + $0x34] sm:$0xf]
    %v259 = vld [vmem:[%s5 + $0x38] sm:$0xf]
    %v260 = vld [vmem:[%s5 + $0x3c] sm:$0xf]
    %v261 = vld [vmem:[%s6] sm:$0x1]
    %v263 = vlaneseq
    %v264 = vshrl.u32 %v263, 7
    %v265 = vsub.s32 0, %v264
    %v266 = vrot.slane %v261, %v265
    %v284 = vunpack.c.l.b16 %v245
    %v285 = vunpack.c.l.b16 %v246
    %v286 = vunpack.c.l.b16 %v247
    %v287 = vunpack.c.l.b16 %v248
    %v288 = vunpack.c.l.b16 %v249
    %v289 = vunpack.c.l.b16 %v250
    %v290 = vunpack.c.l.b16 %v251
    %v291 = vunpack.c.l.b16 %v252
    %v292 = vunpack.c.l.b16 %v253
    %v293 = vunpack.c.l.b16 %v254
    %v294 = vunpack.c.l.b16 %v255
    %v295 = vunpack.c.l.b16 %v256
    %v296 = vunpack.c.l.b16 %v257
    %v297 = vunpack.c.l.b16 %v258
    %v298 = vunpack.c.l.b16 %v259
    %v299 = vunpack.c.l.b16 %v260
    %v300 = vpack.c.b16 %v285, %v284
    %v301 = vpack.c.b16 %v287, %v286
    %v302 = vpack.c.b16 %v289, %v288
    %v303 = vpack.c.b16 %v291, %v290
    %v304 = vpack.c.b16 %v293, %v292
    %v305 = vpack.c.b16 %v295, %v294
    %v306 = vpack.c.b16 %v297, %v296
    %v307 = vpack.c.b16 %v299, %v298
    %316 = vmatprep.subr.bf16.mxu0 0
    %317 = vmatpush1.bf16.msra.mxu0 %v300
    %318 = vmatprep.subr.bf16.mxu0 0
    %319 = vmatpush1.bf16.msra.mxu0 %v301
    %320 = vmatprep.subr.bf16.mxu0 0
    %321 = vmatpush1.bf16.msra.mxu0 %v302
    %322 = vmatprep.subr.bf16.mxu0 0
    %323 = vmatpush1.bf16.msra.mxu0 %v303
    %324 = vmatprep.subr.bf16.mxu0 0
    %325 = vmatpush1.bf16.msra.mxu0 %v304
    %326 = vmatprep.subr.bf16.mxu0 0
    %327 = vmatpush1.bf16.msra.mxu0 %v305
    %328 = vmatprep.subr.bf16.mxu0 0
    %329 = vmatpush1.bf16.msra.mxu0 %v306
    %330 = vmatprep.subr.bf16.mxu0 0
    %331 = vmatpush1.bf16.msra.mxu0 %v307
    %332 = vmatprep.subr.bf16.mxu0 0
    %333 = vmatpush1.bf16.msra.mxu0 0
    %334 = vmatprep.subr.bf16.mxu0 0
    %335 = vmatpush1.bf16.msra.mxu0 0
    %336 = vmatprep.subr.bf16.mxu0 0
    %337 = vmatpush1.bf16.msra.mxu0 0
    %338 = vmatprep.subr.bf16.mxu0 0
    %339 = vmatpush1.bf16.msra.mxu0 0
    %340 = vmatprep.subr.bf16.mxu0 0
    %341 = vmatpush1.bf16.msra.mxu0 0
    %342 = vmatprep.subr.bf16.mxu0 0
    %343 = vmatpush1.bf16.msra.mxu0 0
    %344 = vmatprep.subr.bf16.mxu0 0
    %345 = vmatpush1.bf16.msra.mxu0 0
    %346 = vmatprep.subr.bf16.mxu0 0
    %347 = vmatpush1.bf16.msra.mxu0 0
    %348 = vmatprep.mubr.bf16.mxu0 0
    %349 = vmatmul.mubr.bf16.gmra.mrb[0].mxu0 %v237
    %v350 = vpop.f32.mrb[0].mxu0
    %v351 = vadd.f32 %v266, %v350
    %v352 = vpop.f32.mrb[0].mxu0
    %v353 = vpop.f32.mrb[0].mxu0
    %v354 = vadd.f32 %v266, %v353
    %v355 = vpop.f32.mrb[0].mxu0
    %356 = vmatprep.mubr.bf16.mxu0 0
    %357 = vmatmul.mubr.bf16.gmra.mrb[0].mxu0 %v238
    %v358 = vpop.f32.mrb[0].mxu0
    %v359 = vadd.f32 %v266, %v358
    %v360 = vpop.f32.mrb[0].mxu0
    %v361 = vpop.f32.mrb[0].mxu0
    %v362 = vadd.f32 %v266, %v361
    %v363 = vpop.f32.mrb[0].mxu0
    %364 = vmatprep.mubr.bf16.mxu0 0
    %365 = vmatmul.mubr.bf16.gmra.mrb[0].mxu0 %v239
    %v366 = vpop.f32.mrb[0].mxu0
    %v367 = vadd.f32 %v266, %v366
    %v368 = vpop.f32.mrb[0].mxu0
    %v369 = vpop.f32.mrb[0].mxu0
    %v370 = vadd.f32 %v266, %v369
    %v371 = vpop.f32.mrb[0].mxu0
    %372 = vmatprep.mubr.bf16.mxu0 0
    %373 = vmatmul.mubr.bf16.gmra.mrb[0].mxu0 %v240
    %v374 = vpop.f32.mrb[0].mxu0
    %v375 = vadd.f32 %v266, %v374
    %v376 = vpop.f32.mrb[0].mxu0
    %v377 = vpop.f32.mrb[0].mxu0
    %v378 = vadd.f32 %v266, %v377
    %v379 = vpop.f32.mrb[0].mxu0
    %380 = vmatprep.mubr.bf16.mxu0 0
    %381 = vmatmul.mubr.bf16.gmra.mrb[0].mxu0 %v241
    %v382 = vpop.f32.mrb[0].mxu0
    %v383 = vadd.f32 %v266, %v382
    %v384 = vpop.f32.mrb[0].mxu0
    %v385 = vpop.f32.mrb[0].mxu0
    %v386 = vadd.f32 %v266, %v385
    %v387 = vpop.f32.mrb[0].mxu0
    %388 = vmatprep.mubr.bf16.mxu0 0
    %389 = vmatmul.mubr.bf16.gmra.mrb[0].mxu0 %v242
    %v390 = vpop.f32.mrb[0].mxu0
    %v391 = vadd.f32 %v266, %v390
    %v392 = vpop.f32.mrb[0].mxu0
    %v393 = vpop.f32.mrb[0].mxu0
    %v394 = vadd.f32 %v266, %v393
    %v395 = vpop.f32.mrb[0].mxu0
    %396 = vmatprep.mubr.bf16.mxu0 0
    %397 = vmatmul.mubr.bf16.gmra.mrb[0].mxu0 %v243
    %v398 = vpop.f32.mrb[0].mxu0
    %v399 = vadd.f32 %v266, %v398
    %v400 = vpop.f32.mrb[0].mxu0
    %v401 = vpop.f32.mrb[0].mxu0
    %v402 = vadd.f32 %v266, %v401
    %v403 = vpop.f32.mrb[0].mxu0
    %404 = vmatprep.mubr.bf16.mxu0 0
    %405 = vmatmul.mubr.bf16.gmra.mrb[0].mxu0 %v244
    %v406 = vpop.f32.mrb[0].mxu0
    %v407 = vadd.f32 %v266, %v406
    %v408 = vpop.f32.mrb[0].mxu0
    %v409 = vpop.f32.mrb[0].mxu0
    %v410 = vadd.f32 %v266, %v409
    %v411 = vpop.f32.mrb[0].mxu0
    %412 = vdwg.mxu0
    %v413 = vmax.f32 %v351, 0.0
    %v414 = vmax.f32 %v354, 0.0
    %v415 = vmax.f32 %v359, 0.0
    %v416 = vmax.f32 %v362, 0.0
    %v417 = vmax.f32 %v367, 0.0
    %v418 = vmax.f32 %v370, 0.0
    %v419 = vmax.f32 %v375, 0.0
    %v420 = vmax.f32 %v378, 0.0
    %v421 = vmax.f32 %v383, 0.0
    %v422 = vmax.f32 %v386, 0.0
    %v423 = vmax.f32 %v391, 0.0
    %v424 = vmax.f32 %v394, 0.0
    %v425 = vmax.f32 %v399, 0.0
    %v426 = vmax.f32 %v402, 0.0
    %v427 = vmax.f32 %v407, 0.0
    %v428 = vmax.f32 %v410, 0.0
    %v429 = vpack.c.bf16 %v414, %v413
    %v430 = vpack.c.bf16 %v416, %v415
    %v431 = vpack.c.bf16 %v418, %v417
    %v432 = vpack.c.bf16 %v420, %v419
    %v433 = vpack.c.bf16 %v422, %v421
    %v434 = vpack.c.bf16 %v424, %v423
    %v435 = vpack.c.bf16 %v426, %v425
    %v436 = vpack.c.bf16 %v428, %v427
    %v437 = vld [vmem:[%s7] sm:$0xf]
    %v438 = vld [vmem:[%s7 + $0x4] sm:$0xf]
    %v439 = vld [vmem:[%s7 + $0x8] sm:$0xf]
    %v440 = vld [vmem:[%s7 + $0xc] sm:$0xf]
    %v441 = vld [vmem:[%s7 + $0x10] sm:$0xf]
    %v442 = vld [vmem:[%s7 + $0x14] sm:$0xf]
    %v443 = vld [vmem:[%s7 + $0x18] sm:$0xf]
    %v444 = vld [vmem:[%s7 + $0x1c] sm:$0xf]
    %v445 = vld [vmem:[%s7 + $0x20] sm:$0xf]
    %v446 = vld [vmem:[%s7 + $0x24] sm:$0xf]
    %v447 = vld [vmem:[%s7 + $0x28] sm:$0xf]
    %v448 = vld [vmem:[%s7 + $0x2c] sm:$0xf]
    %v449 = vld [vmem:[%s7 + $0x30] sm:$0xf]
    %v450 = vld [vmem:[%s7 + $0x34] sm:$0xf]
    %v451 = vld [vmem:[%s7 + $0x38] sm:$0xf]
    %v452 = vld [vmem:[%s7 + $0x3c] sm:$0xf]
    %v453 = vld [vmem:[%s8] sm:$0x1]
    %v455 = vlaneseq
    %v456 = vshrl.u32 %v455, 7
    %v457 = vsub.s32 0, %v456
    %v458 = vrot.slane %v453, %v457
    %v476 = vunpack.c.l.b16 %v437
    %v477 = vunpack.c.l.b16 %v438
    %v478 = vunpack.c.l.b16 %v439
    %v479 = vunpack.c.l.b16 %v440
    %v480 = vunpack.c.l.b16 %v441
    %v481 = vunpack.c.l.b16 %v442
    %v482 = vunpack.c.l.b16 %v443
    %v483 = vunpack.c.l.b16 %v444
    %v484 = vunpack.c.l.b16 %v445
    %v485 = vunpack.c.l.b16 %v446
    %v486 = vunpack.c.l.b16 %v447
    %v487 = vunpack.c.l.b16 %v448
    %v488 = vunpack.c.l.b16 %v449
    %v489 = vunpack.c.l.b16 %v450
    %v490 = vunpack.c.l.b16 %v451
    %v491 = vunpack.c.l.b16 %v452
    %v492 = vpack.c.b16 %v477, %v476
    %v493 = vpack.c.b16 %v479, %v478
    %v494 = vpack.c.b16 %v481, %v480
    %v495 = vpack.c.b16 %v483, %v482
    %v496 = vpack.c.b16 %v485, %v484
    %v497 = vpack.c.b16 %v487, %v486
    %v498 = vpack.c.b16 %v489, %v488
    %v499 = vpack.c.b16 %v491, %v490
    %508 = vmatprep.subr.bf16.mxu0 0
    %509 = vmatpush1.bf16.msra.mxu0 %v492
    %510 = vmatprep.subr.bf16.mxu0 0
    %511 = vmatpush1.bf16.msra.mxu0 %v493
    %512 = vmatprep.subr.bf16.mxu0 0
    %513 = vmatpush1.bf16.msra.mxu0 %v494
    %514 = vmatprep.subr.bf16.mxu0 0
    %515 = vmatpush1.bf16.msra.mxu0 %v495
    %516 = vmatprep.subr.bf16.mxu0 0
    %517 = vmatpush1.bf16.msra.mxu0 %v496
    %518 = vmatprep.subr.bf16.mxu0 0
    %519 = vmatpush1.bf16.msra.mxu0 %v497
    %520 = vmatprep.subr.bf16.mxu0 0
    %521 = vmatpush1.bf16.msra.mxu0 %v498
    %522 = vmatprep.subr.bf16.mxu0 0
    %523 = vmatpush1.bf16.msra.mxu0 %v499
    %524 = vmatprep.subr.bf16.mxu0 0
    %525 = vmatpush1.bf16.msra.mxu0 0
    %526 = vmatprep.subr.bf16.mxu0 0
    %527 = vmatpush1.bf16.msra.mxu0 0
    %528 = vmatprep.subr.bf16.mxu0 0
    %529 = vmatpush1.bf16.msra.mxu0 0
    %530 = vmatprep.subr.bf16.mxu0 0
    %531 = vmatpush1.bf16.msra.mxu0 0
    %532 = vmatprep.subr.bf16.mxu0 0
    %533 = vmatpush1.bf16.msra.mxu0 0
    %534 = vmatprep.subr.bf16.mxu0 0
    %535 = vmatpush1.bf16.msra.mxu0 0
    %536 = vmatprep.subr.bf16.mxu0 0
    %537 = vmatpush1.bf16.msra.mxu0 0
    %538 = vmatprep.subr.bf16.mxu0 0
    %539 = vmatpush1.bf16.msra.mxu0 0
    %540 = vmatprep.mubr.bf16.mxu0 0
    %541 = vmatmul.mubr.bf16.gmra.mrb[0].mxu0 %v429
    %v542 = vpop.f32.mrb[0].mxu0
    %v543 = vadd.f32 %v458, %v542
    %v544 = vpop.f32.mrb[0].mxu0
    %v545 = vpop.f32.mrb[0].mxu0
    %v546 = vadd.f32 %v458, %v545
    %v547 = vpop.f32.mrb[0].mxu0
    %548 = vmatprep.mubr.bf16.mxu0 0
    %549 = vmatmul.mubr.bf16.gmra.mrb[0].mxu0 %v430
    %v550 = vpop.f32.mrb[0].mxu0
    %v551 = vadd.f32 %v458, %v550
    %v552 = vpop.f32.mrb[0].mxu0
    %v553 = vpop.f32.mrb[0].mxu0
    %v554 = vadd.f32 %v458, %v553
    %v555 = vpop.f32.mrb[0].mxu0
    %556 = vmatprep.mubr.bf16.mxu0 0
    %557 = vmatmul.mubr.bf16.gmra.mrb[0].mxu0 %v431
    %v558 = vpop.f32.mrb[0].mxu0
    %v559 = vadd.f32 %v458, %v558
    %v560 = vpop.f32.mrb[0].mxu0
    %v561 = vpop.f32.mrb[0].mxu0
    %v562 = vadd.f32 %v458, %v561
    %v563 = vpop.f32.mrb[0].mxu0
    %564 = vmatprep.mubr.bf16.mxu0 0
    %565 = vmatmul.mubr.bf16.gmra.mrb[0].mxu0 %v432
    %v566 = vpop.f32.mrb[0].mxu0
    %v567 = vadd.f32 %v458, %v566
    %v568 = vpop.f32.mrb[0].mxu0
    %v569 = vpop.f32.mrb[0].mxu0
    %v570 = vadd.f32 %v458, %v569
    %v571 = vpop.f32.mrb[0].mxu0
    %572 = vmatprep.mubr.bf16.mxu0 0
    %573 = vmatmul.mubr.bf16.gmra.mrb[0].mxu0 %v433
    %v574 = vpop.f32.mrb[0].mxu0
    %v575 = vadd.f32 %v458, %v574
    %v576 = vpop.f32.mrb[0].mxu0
    %v577 = vpop.f32.mrb[0].mxu0
    %v578 = vadd.f32 %v458, %v577
    %v579 = vpop.f32.mrb[0].mxu0
    %580 = vmatprep.mubr.bf16.mxu0 0
    %581 = vmatmul.mubr.bf16.gmra.mrb[0].mxu0 %v434
    %v582 = vpop.f32.mrb[0].mxu0
    %v583 = vadd.f32 %v458, %v582
    %v584 = vpop.f32.mrb[0].mxu0
    %v585 = vpop.f32.mrb[0].mxu0
    %v586 = vadd.f32 %v458, %v585
    %v587 = vpop.f32.mrb[0].mxu0
    %588 = vmatprep.mubr.bf16.mxu0 0
    %589 = vmatmul.mubr.bf16.gmra.mrb[0].mxu0 %v435
    %v590 = vpop.f32.mrb[0].mxu0
    %v591 = vadd.f32 %v458, %v590
    %v592 = vpop.f32.mrb[0].mxu0
    %v593 = vpop.f32.mrb[0].mxu0
    %v594 = vadd.f32 %v458, %v593
    %v595 = vpop.f32.mrb[0].mxu0
    %596 = vmatprep.mubr.bf16.mxu0 0
    %597 = vmatmul.mubr.bf16.gmra.mrb[0].mxu0 %v436
    %v598 = vpop.f32.mrb[0].mxu0
    %v599 = vadd.f32 %v458, %v598
    %v600 = vpop.f32.mrb[0].mxu0
    %v601 = vpop.f32.mrb[0].mxu0
    %v602 = vadd.f32 %v458, %v601
    %v603 = vpop.f32.mrb[0].mxu0
    %604 = vdwg.mxu0
    %v605 = vld [vmem:[%s0] sm:$0x1]
    %v606 = vlaneseq
    %v607 = vshrl.u32 %v606, 7
    %v608 = vlaneseq
    %v609 = vshrl.u32 %v608, 7
    %v610 = vsub.s32 0, %v609
    %v611 = vrot.slane %v605, %v610
    %vm612 = vcmp.eq.s32.totalorder %v607, %v611
    %v613 = vsel %vm612, 1, 0
    %v614 = vcvt.s32.f32 %v613
    %v615 = vpack.c.bf16 %v614, %v614
    %v616 = vld [vmem:[#allocation2] sm:$0xff]
    %v617 = vpack.c.bf16 %v546, %v543
    %v618 = vpack.c.bf16 %v554, %v551
    %v619 = vpack.c.bf16 %v562, %v559
    %v620 = vpack.c.bf16 %v570, %v567
    %v621 = vpack.c.bf16 %v578, %v575
    %v622 = vpack.c.bf16 %v586, %v583
    %v623 = vpack.c.bf16 %v594, %v591
    %v624 = vpack.c.bf16 %v602, %v599
    %625 = vmatprep.subr.bf16.mxu0 0
    %626 = vmatpush1.bf16.msra.mxu0 %v617
    %627 = vmatprep.subr.bf16.mxu0 0
    %628 = vmatpush1.bf16.msra.mxu0 %v618
    %629 = vmatprep.subr.bf16.mxu0 0
    %630 = vmatpush1.bf16.msra.mxu0 %v619
    %631 = vmatprep.subr.bf16.mxu0 0
    %632 = vmatpush1.bf16.msra.mxu0 %v620
    %633 = vmatprep.subr.bf16.mxu0 0
    %634 = vmatpush1.bf16.msra.mxu0 %v621
    %635 = vmatprep.subr.bf16.mxu0 0
    %636 = vmatpush1.bf16.msra.mxu0 %v622
    %637 = vmatprep.subr.bf16.mxu0 0
    %638 = vmatpush1.bf16.msra.mxu0 %v623
    %639 = vmatprep.subr.bf16.mxu0 0
    %640 = vmatpush1.bf16.msra.mxu0 %v624
    %641 = vmatprep.subr.bf16.mxu0 0
    %642 = vmatpush1.bf16.msra.mxu0 0
    %643 = vmatprep.subr.bf16.mxu0 0
    %644 = vmatpush1.bf16.msra.mxu0 0
    %645 = vmatprep.subr.bf16.mxu0 0
    %646 = vmatpush1.bf16.msra.mxu0 0
    %647 = vmatprep.subr.bf16.mxu0 0
    %648 = vmatpush1.bf16.msra.mxu0 0
    %649 = vmatprep.subr.bf16.mxu0 0
    %650 = vmatpush1.bf16.msra.mxu0 0
    %651 = vmatprep.subr.bf16.mxu0 0
    %652 = vmatpush1.bf16.msra.mxu0 0
    %653 = vmatprep.subr.bf16.mxu0 0
    %654 = vmatpush1.bf16.msra.mxu0 0
    %655 = vmatprep.subr.bf16.mxu0 0
    %656 = vmatpush1.bf16.msra.mxu0 0
    %657 = vmatprep.mubr.bf16.mxu0 0
    %658 = vmatmul.mubr.bf16.gmra.mrb[0].mxu0 %v615
    %v659 = vpop.f32.mrb[0].mxu0
    %v660 = vadd.f32 0.0, %v659
    %v661 = vpop.f32.mrb[0].mxu0
    %v662 = vpop.f32.mrb[0].mxu0
    %v663 = vpop.f32.mrb[0].mxu0
    %664 = vdwg.mxu0
    %v665 = vadd.f32 %v616, %v660
    %666 = vst [vmem:[#allocation2] sm:$0xff] %v665
    // Predicated region
    $region66: #{tpu_custom_call.1} parent=1 // pred_check
      %p667 = pneg %p74
    $region67: #{tpu_custom_call.1} parent=1 // pred_check_branch
      %669 = sbr.rel (%p667) target = $region69
    $region68: #{tpu_custom_call.1} parent=1 // pred_region
      %v670 = vld [vmem:[#allocation2] sm:$0xff]
      %v671 = vld [vmem:[%s2] sm:$0xff]
      %v672 = vmax.f32 %v671, 1.0
      %674 = vset.pattern.permute.xlu0 0
      %675 = vperm.xlu0 %674, %v672
      %v676 = vpop.permute.xlu0 %675
      %v678 = vrcp.pop %v676
      %v679 = vmul.f32 %v670, %v678
      %v680 = vpack.c.bf16 %v679, %v679
      %v681 = vld [vmem:[#allocation3] sm:$0xf]
      %v682 = vld [vmem:[#allocation3 + $0x4] sm:$0xf]
      %v683 = vld [vmem:[#allocation3 + $0x8] sm:$0xf]
      %v684 = vld [vmem:[#allocation3 + $0xc] sm:$0xf]
      %v685 = vld [vmem:[#allocation3 + $0x10] sm:$0xf]
      %v686 = vld [vmem:[#allocation3 + $0x14] sm:$0xf]
      %v687 = vld [vmem:[#allocation3 + $0x18] sm:$0xf]
      %v688 = vld [vmem:[#allocation3 + $0x1c] sm:$0xf]
      %v689 = vld [vmem:[#allocation3 + $0x20] sm:$0xf]
      %v690 = vld [vmem:[#allocation3 + $0x24] sm:$0xf]
      %v691 = vld [vmem:[#allocation3 + $0x28] sm:$0xf]
      %v692 = vld [vmem:[#allocation3 + $0x2c] sm:$0xf]
      %v693 = vld [vmem:[#allocation3 + $0x30] sm:$0xf]
      %v694 = vld [vmem:[#allocation3 + $0x34] sm:$0xf]
      %v695 = vld [vmem:[#allocation3 + $0x38] sm:$0xf]
      %v696 = vld [vmem:[#allocation3 + $0x3c] sm:$0xf]
      %v697 = vld [vmem:[%s10] sm:$0x1]
      %v699 = vlaneseq
      %v700 = vshrl.u32 %v699, 7
      %v701 = vsub.s32 0, %v700
      %v702 = vrot.slane %v697, %v701
      %v720 = vunpack.c.l.b16 %v681
      %v721 = vunpack.c.l.b16 %v682
      %v722 = vunpack.c.l.b16 %v683
      %v723 = vunpack.c.l.b16 %v684
      %v724 = vunpack.c.l.b16 %v685
      %v725 = vunpack.c.l.b16 %v686
      %v726 = vunpack.c.l.b16 %v687
      %v727 = vunpack.c.l.b16 %v688
      %v728 = vunpack.c.l.b16 %v689
      %v729 = vunpack.c.l.b16 %v690
      %v730 = vunpack.c.l.b16 %v691
      %v731 = vunpack.c.l.b16 %v692
      %v732 = vunpack.c.l.b16 %v693
      %v733 = vunpack.c.l.b16 %v694
      %v734 = vunpack.c.l.b16 %v695
      %v735 = vunpack.c.l.b16 %v696
      %v736 = vpack.c.b16 %v721, %v720
      %v737 = vpack.c.b16 %v723, %v722
      %v738 = vpack.c.b16 %v725, %v724
      %v739 = vpack.c.b16 %v727, %v726
      %v740 = vpack.c.b16 %v729, %v728
      %v741 = vpack.c.b16 %v731, %v730
      %v742 = vpack.c.b16 %v733, %v732
      %v743 = vpack.c.b16 %v735, %v734
      %752 = vmatprep.subr.bf16.mxu0 0
      %753 = vmatpush1.bf16.msra.mxu0 %v736
      %754 = vmatprep.subr.bf16.mxu0 0
      %755 = vmatpush1.bf16.msra.mxu0 %v737
      %756 = vmatprep.subr.bf16.mxu0 0
      %757 = vmatpush1.bf16.msra.mxu0 %v738
      %758 = vmatprep.subr.bf16.mxu0 0
      %759 = vmatpush1.bf16.msra.mxu0 %v739
      %760 = vmatprep.subr.bf16.mxu0 0
      %761 = vmatpush1.bf16.msra.mxu0 %v740
      %762 = vmatprep.subr.bf16.mxu0 0
      %763 = vmatpush1.bf16.msra.mxu0 %v741
      %764 = vmatprep.subr.bf16.mxu0 0
      %765 = vmatpush1.bf16.msra.mxu0 %v742
      %766 = vmatprep.subr.bf16.mxu0 0
      %767 = vmatpush1.bf16.msra.mxu0 %v743
      %768 = vmatprep.subr.bf16.mxu0 0
      %769 = vmatpush1.bf16.msra.mxu0 0
      %770 = vmatprep.subr.bf16.mxu0 0
      %771 = vmatpush1.bf16.msra.mxu0 0
      %772 = vmatprep.subr.bf16.mxu0 0
      %773 = vmatpush1.bf16.msra.mxu0 0
      %774 = vmatprep.subr.bf16.mxu0 0
      %775 = vmatpush1.bf16.msra.mxu0 0
      %776 = vmatprep.subr.bf16.mxu0 0
      %777 = vmatpush1.bf16.msra.mxu0 0
      %778 = vmatprep.subr.bf16.mxu0 0
      %779 = vmatpush1.bf16.msra.mxu0 0
      %780 = vmatprep.subr.bf16.mxu0 0
      %781 = vmatpush1.bf16.msra.mxu0 0
      %782 = vmatprep.subr.bf16.mxu0 0
      %783 = vmatpush1.bf16.msra.mxu0 0
      %784 = vmatprep.mubr.bf16.mxu0 0
      %785 = vmatmul.mubr.bf16.gmra.mrb[0].mxu0 %v680
      %v786 = vpop.f32.mrb[0].mxu0
      %v787 = vadd.f32 %v702, %v786
      %v788 = vpop.f32.mrb[0].mxu0
      %v789 = vpop.f32.mrb[0].mxu0
      %v790 = vpop.f32.mrb[0].mxu0
      %791 = vdwg.mxu0
      %v792 = vmax.f32 %v787, 0.0
      %v793 = vpack.c.bf16 %v792, %v792
      %v794 = vld [vmem:[#allocation6] sm:$0xf]
      %v795 = vld [vmem:[#allocation6 + $0x4] sm:$0xf]
      %v796 = vld [vmem:[#allocation6 + $0x8] sm:$0xf]
      %v797 = vld [vmem:[#allocation6 + $0xc] sm:$0xf]
      %v798 = vld [vmem:[#allocation6 + $0x10] sm:$0xf]
      %v799 = vld [vmem:[#allocation6 + $0x14] sm:$0xf]
      %v800 = vld [vmem:[#allocation6 + $0x18] sm:$0xf]
      %v801 = vld [vmem:[#allocation6 + $0x1c] sm:$0xf]
      %v802 = vld [vmem:[#allocation6 + $0x20] sm:$0xf]
      %v803 = vld [vmem:[#allocation6 + $0x24] sm:$0xf]
      %v804 = vld [vmem:[#allocation6 + $0x28] sm:$0xf]
      %v805 = vld [vmem:[#allocation6 + $0x2c] sm:$0xf]
      %v806 = vld [vmem:[#allocation6 + $0x30] sm:$0xf]
      %v807 = vld [vmem:[#allocation6 + $0x34] sm:$0xf]
      %v808 = vld [vmem:[#allocation6 + $0x38] sm:$0xf]
      %v809 = vld [vmem:[#allocation6 + $0x3c] sm:$0xf]
      %v810 = vld [vmem:[%s12] sm:$0x1]
      %v812 = vlaneseq
      %v813 = vshrl.u32 %v812, 7
      %v814 = vsub.s32 0, %v813
      %v815 = vrot.slane %v810, %v814
      %v833 = vunpack.c.l.b16 %v794
      %v834 = vunpack.c.l.b16 %v795
      %v835 = vunpack.c.l.b16 %v796
      %v836 = vunpack.c.l.b16 %v797
      %v837 = vunpack.c.l.b16 %v798
      %v838 = vunpack.c.l.b16 %v799
      %v839 = vunpack.c.l.b16 %v800
      %v840 = vunpack.c.l.b16 %v801
      %v841 = vunpack.c.l.b16 %v802
      %v842 = vunpack.c.l.b16 %v803
      %v843 = vunpack.c.l.b16 %v804
      %v844 = vunpack.c.l.b16 %v805
      %v845 = vunpack.c.l.b16 %v806
      %v846 = vunpack.c.l.b16 %v807
      %v847 = vunpack.c.l.b16 %v808
      %v848 = vunpack.c.l.b16 %v809
      %v849 = vpack.c.b16 %v834, %v833
      %v850 = vpack.c.b16 %v836, %v835
      %v851 = vpack.c.b16 %v838, %v837
      %v852 = vpack.c.b16 %v840, %v839
      %v853 = vpack.c.b16 %v842, %v841
      %v854 = vpack.c.b16 %v844, %v843
      %v855 = vpack.c.b16 %v846, %v845
      %v856 = vpack.c.b16 %v848, %v847
      %865 = vmatprep.subr.bf16.mxu0 0
      %866 = vmatpush1.bf16.msra.mxu0 %v849
      %867 = vmatprep.subr.bf16.mxu0 0
      %868 = vmatpush1.bf16.msra.mxu0 %v850
      %869 = vmatprep.subr.bf16.mxu0 0
      %870 = vmatpush1.bf16.msra.mxu0 %v851
      %871 = vmatprep.subr.bf16.mxu0 0
      %872 = vmatpush1.bf16.msra.mxu0 %v852
      %873 = vmatprep.subr.bf16.mxu0 0
      %874 = vmatpush1.bf16.msra.mxu0 %v853
      %875 = vmatprep.subr.bf16.mxu0 0
      %876 = vmatpush1.bf16.msra.mxu0 %v854
      %877 = vmatprep.subr.bf16.mxu0 0
      %878 = vmatpush1.bf16.msra.mxu0 %v855
      %879 = vmatprep.subr.bf16.mxu0 0
      %880 = vmatpush1.bf16.msra.mxu0 %v856
      %881 = vmatprep.subr.bf16.mxu0 0
      %882 = vmatpush1.bf16.msra.mxu0 0
      %883 = vmatprep.subr.bf16.mxu0 0
      %884 = vmatpush1.bf16.msra.mxu0 0
      %885 = vmatprep.subr.bf16.mxu0 0
      %886 = vmatpush1.bf16.msra.mxu0 0
      %887 = vmatprep.subr.bf16.mxu0 0
      %888 = vmatpush1.bf16.msra.mxu0 0
      %889 = vmatprep.subr.bf16.mxu0 0
      %890 = vmatpush1.bf16.msra.mxu0 0
      %891 = vmatprep.subr.bf16.mxu0 0
      %892 = vmatpush1.bf16.msra.mxu0 0
      %893 = vmatprep.subr.bf16.mxu0 0
      %894 = vmatpush1.bf16.msra.mxu0 0
      %895 = vmatprep.subr.bf16.mxu0 0
      %896 = vmatpush1.bf16.msra.mxu0 0
      %897 = vmatprep.mubr.bf16.mxu0 0
      %898 = vmatmul.mubr.bf16.gmra.mrb[0].mxu0 %v793
      %v899 = vpop.f32.mrb[0].mxu0
      %v900 = vadd.f32 %v815, %v899
      %v901 = vpop.f32.mrb[0].mxu0
      %v902 = vpop.f32.mrb[0].mxu0
      %v903 = vpop.f32.mrb[0].mxu0
      %904 = vdwg.mxu0
      %905 = vst [vmem:[#allocation8] sm:$0xff] %v900
    $region69: #{tpu_custom_call.1} parent=1 // pred_fallthru
      _
    // Predicated region
    $region70: #{tpu_custom_call.1} parent=1 // pred_check
      _
    $region71: #{tpu_custom_call.1} parent=1 // pred_check_branch
      %907 = sbr.rel (0) target = $region73
    $region72: #{tpu_custom_call.1} parent=1 // pred_region
      %s909 = ssub.s32 128, 128
      %910 = vsyncadd [#allocation5], %s909
      %s912 = sshll.u32 [#allocation8], 4
      %s913 = int_to_ptr.vmem [resolvable:$true] %s912
      %915 = dma.vmem_to_hbm [thread:$0]  %s913, 128, %s13, [#allocation5]
    $region73: #{tpu_custom_call.1} parent=1 // pred_fallthru
      _
    // Predicated region
    $region74: #{tpu_custom_call.1} parent=1 // pred_check
      _
    $region75: #{tpu_custom_call.1} parent=1 // pred_check_branch
      %917 = sbr.rel (0) target = $region77
    $region76: #{tpu_custom_call.1} parent=1 // pred_region
      %918 = dma.done [#allocation5], 128
    $region77: #{tpu_custom_call.1} parent=1 // pred_fallthru
      _
    %919 = vsyncpa [#allocation4], 1
    %920 = vsyncpa [#allocation7], 1
    %921 = vsyncpa [#allocation5], 1

// kernel: tpu_custom_call.1
$region0: #{tpu_custom_call.1}
  #allocation0 [shape = 'u32[]', space=smem, size = 0x4, offset = 0x4, fixed_abs, tag = 'smem constant byte address 0x4 - core index']
  #allocation1 [shape = 'u32[144,128]{1,0:T(1,128)}', space=vmem, size = 0x12000, scoped, tag = 'internal scratch']
  #allocation2 [shape = 'f32[8,128]{1,0:T(8,128)}', space=vmem, size = 0x1000, scoped, tag = 'scratch operand']
  %s0 = inlined_call_operand.vmem [shape: s32[1,128], index: 0, kind: input, shape index: {}]
  %s1 = inlined_call_operand.vmem [shape: f32[128,8], index: 1, kind: input, shape index: {}]
  %s2 = inlined_call_operand.vmem [shape: f32[8,1], index: 2, kind: input, shape index: {}]
  %s3 = inlined_call_operand.vmem [shape: bf16[8,128], index: 3, kind: input, shape index: {}]
  %s4 = inlined_call_operand.vmem [shape: f32[1,128], index: 4, kind: input, shape index: {}]
  %s5 = inlined_call_operand.vmem [shape: bf16[128,128], index: 5, kind: input, shape index: {}]
  %s6 = inlined_call_operand.vmem [shape: f32[1,128], index: 6, kind: input, shape index: {}]
  %s7 = inlined_call_operand.vmem [shape: bf16[128,128], index: 7, kind: input, shape index: {}]
  %s8 = inlined_call_operand.vmem [shape: f32[1,128], index: 8, kind: input, shape index: {}]
  %s9 = inlined_call_operand.hbm [shape: bf16[128,128], index: 9, kind: input, shape index: {}]
  %s10 = inlined_call_operand.vmem [shape: f32[1,128], index: 10, kind: input, shape index: {}]
  %s11 = inlined_call_operand.hbm [shape: bf16[128,128], index: 11, kind: input, shape index: {}]
  %s12 = inlined_call_operand.vmem [shape: f32[1,128], index: 12, kind: input, shape index: {}]
  %s13 = inlined_call_operand.hbm [shape: f32[8,128], index: 13, kind: output, shape index: {}]
  %s14 = sld [smem:[#allocation0]]
  $region78: #{tpu_custom_call.1} parent=0
    _
  %s16 = ssub.s32 1, %s14
  %s17 = scalar_select 0, %s16, %s14
  $region1: #{tpu_custom_call.1} parent=0
    #allocation3 [shape = 'u8[32768]{0}', space=vmem, size = 0x8000, scoped, tag = 'input window, operand 9, single buffered']
    #allocation4 [shape = 's32[1]{0}', space=sflag, size = 0x4, scoped, tag = 'scoped memory for tpu_custom_call.1']
    #allocation5 [shape = 's32[1]{0}', space=sflag, size = 0x4, scoped, tag = 'scoped memory for tpu_custom_call.1']
    #allocation6 [shape = 'u8[32768]{0}', space=vmem, size = 0x8000, scoped, tag = 'input window, operand 11, single buffered']
    #allocation7 [shape = 's32[1]{0}', space=sflag, size = 0x4, scoped, tag = 'scoped memory for tpu_custom_call.1']
    #allocation8 [shape = 'u8[4096]{0}', space=vmem, size = 0x1000, scoped, tag = 'output window, operand 0, single buffered']
    %18 = vsyncpa [#allocation4], 0
    %19 = vsyncpa [#allocation7], 0
    %20 = vsyncpa [#allocation5], 0
    // Predicated region
    $region2: #{tpu_custom_call.1} parent=1 // pred_check
      _
    $region3: #{tpu_custom_call.1} parent=1 // pred_check_branch
      %22 = sbr.rel (0) target = $region5
    $region4: #{tpu_custom_call.1} parent=1 // pred_region
      _
    $region5: #{tpu_custom_call.1} parent=1 // pred_fallthru
      _
    // Predicated region
    $region6: #{tpu_custom_call.1} parent=1 // pred_check
      _
    $region7: #{tpu_custom_call.1} parent=1 // pred_check_branch
      %24 = sbr.rel (0) target = $region9
    $region8: #{tpu_custom_call.1} parent=1 // pred_region
      _
    $region9: #{tpu_custom_call.1} parent=1 // pred_fallthru
      _
    // Predicated region
    $region10: #{tpu_custom_call.1} parent=1 // pred_check
      _
    $region11: #{tpu_custom_call.1} parent=1 // pred_check_branch
      %26 = sbr.rel (0) target = $region13
    $region12: #{tpu_custom_call.1} parent=1 // pred_region
      _
    $region13: #{tpu_custom_call.1} parent=1 // pred_fallthru
      _
    // Predicated region
    $region14: #{tpu_custom_call.1} parent=1 // pred_check
      _
    $region15: #{tpu_custom_call.1} parent=1 // pred_check_branch
      %28 = sbr.rel (0) target = $region17
    $region16: #{tpu_custom_call.1} parent=1 // pred_region
      _
    $region17: #{tpu_custom_call.1} parent=1 // pred_fallthru
      _
    // Predicated region
    $region18: #{tpu_custom_call.1} parent=1 // pred_check
      _
    $region19: #{tpu_custom_call.1} parent=1 // pred_check_branch
      %30 = sbr.rel (0) target = $region21
    $region20: #{tpu_custom_call.1} parent=1 // pred_region
      _
    $region21: #{tpu_custom_call.1} parent=1 // pred_fallthru
      _
    // Predicated region
    $region22: #{tpu_custom_call.1} parent=1 // pred_check
      _
    $region23: #{tpu_custom_call.1} parent=1 // pred_check_branch
      %32 = sbr.rel (0) target = $region25
    $region24: #{tpu_custom_call.1} parent=1 // pred_region
      _
    $region25: #{tpu_custom_call.1} parent=1 // pred_fallthru
      _
    // Predicated region
    $region26: #{tpu_custom_call.1} parent=1 // pred_check
      _
    $region27: #{tpu_custom_call.1} parent=1 // pred_check_branch
      %34 = sbr.rel (0) target = $region29
    $region28: #{tpu_custom_call.1} parent=1 // pred_region
      _
    $region29: #{tpu_custom_call.1} parent=1 // pred_fallthru
      _
    // Predicated region
    $region30: #{tpu_custom_call.1} parent=1 // pred_check
      _
    $region31: #{tpu_custom_call.1} parent=1 // pred_check_branch
      %36 = sbr.rel (0) target = $region33
    $region32: #{tpu_custom_call.1} parent=1 // pred_region
      _
    $region33: #{tpu_custom_call.1} parent=1 // pred_fallthru
      _
    // Predicated region
    $region34: #{tpu_custom_call.1} parent=1 // pred_check
      _
    $region35: #{tpu_custom_call.1} parent=1 // pred_check_branch
      %38 = sbr.rel (0) target = $region37
    $region36: #{tpu_custom_call.1} parent=1 // pred_region
      _
    $region37: #{tpu_custom_call.1} parent=1 // pred_fallthru
      _
    // Predicated region
    $region38: #{tpu_custom_call.1} parent=1 // pred_check
      _
    $region39: #{tpu_custom_call.1} parent=1 // pred_check_branch
      %40 = sbr.rel (0) target = $region41
    $region40: #{tpu_custom_call.1} parent=1 // pred_region
      %s42 = ssub.s32 1024, 1024
      %43 = vsyncadd [#allocation4], %s42
      %s44 = sshll.u32 [#allocation3], 4
      %s45 = int_to_ptr.vmem [resolvable:$true] %s44
      %50 = dma.hbm_to_vmem [thread:$0]  %s9, 1024, %s45, [#allocation4], 64, 64, 4
    $region41: #{tpu_custom_call.1} parent=1 // pred_fallthru
      _
    // Predicated region
    $region42: #{tpu_custom_call.1} parent=1 // pred_check
      _
    $region43: #{tpu_custom_call.1} parent=1 // pred_check_branch
      %52 = sbr.rel (0) target = $region45
    $region44: #{tpu_custom_call.1} parent=1 // pred_region
      _
    $region45: #{tpu_custom_call.1} parent=1 // pred_fallthru
      _
    // Predicated region
    $region46: #{tpu_custom_call.1} parent=1 // pred_check
      _
    $region47: #{tpu_custom_call.1} parent=1 // pred_check_branch
      %54 = sbr.rel (0) target = $region49
    $region48: #{tpu_custom_call.1} parent=1 // pred_region
      %s56 = ssub.s32 1024, 1024
      %57 = vsyncadd [#allocation7], %s56
      %s58 = sshll.u32 [#allocation6], 4
      %s59 = int_to_ptr.vmem [resolvable:$true] %s58
      %64 = dma.hbm_to_vmem [thread:$0]  %s11, 1024, %s59, [#allocation7], 64, 64, 4
    $region49: #{tpu_custom_call.1} parent=1 // pred_fallthru
      _
    // Predicated region
    $region50: #{tpu_custom_call.1} parent=1 // pred_check
      _
    $region51: #{tpu_custom_call.1} parent=1 // pred_check_branch
      %66 = sbr.rel (0) target = $region53
    $region52: #{tpu_custom_call.1} parent=1 // pred_region
      _
    $region53: #{tpu_custom_call.1} parent=1 // pred_fallthru
      _
    // Predicated region
    $region54: #{tpu_custom_call.1} parent=1 // pred_check
      _
    $region55: #{tpu_custom_call.1} parent=1 // pred_check_branch
      %68 = sbr.rel (0) target = $region57
    $region56: #{tpu_custom_call.1} parent=1 // pred_region
      %69 = dma.done [#allocation4], 1024
    $region57: #{tpu_custom_call.1} parent=1 // pred_fallthru
      _
    // Predicated region
    $region58: #{tpu_custom_call.1} parent=1 // pred_check
      _
    $region59: #{tpu_custom_call.1} parent=1 // pred_check_branch
      %71 = sbr.rel (0) target = $region61
    $region60: #{tpu_custom_call.1} parent=1 // pred_region
      %72 = dma.done [#allocation7], 1024
    $region61: #{tpu_custom_call.1} parent=1 // pred_fallthru
      _
    %p74 = scmp.eq.s32.totalorder 0, 0
    // Predicated region
    $region62: #{tpu_custom_call.1} parent=1 // pred_check
      %p75 = pneg %p74
    $region63: #{tpu_custom_call.1} parent=1 // pred_check_branch
      %77 = sbr.rel (%p75) target = $region65
    $region64: #{tpu_custom_call.1} parent=1 // pred_region
      %78 = vst [vmem:[#allocation2] sm:$0xff] 0.0
    $region65: #{tpu_custom_call.1} parent=1 // pred_fallthru
      _
    %v79 = vld [vmem:[%s1] sm:$0xff]
    %v80 = vld [vmem:[%s1 + $0x8] sm:$0xff]
    %v81 = vld [vmem:[%s1 + $0x10] sm:$0xff]
    %v82 = vld [vmem:[%s1 + $0x18] sm:$0xff]
    %v83 = vld [vmem:[%s1 + $0x20] sm:$0xff]
    %v84 = vld [vmem:[%s1 + $0x28] sm:$0xff]
    %v85 = vld [vmem:[%s1 + $0x30] sm:$0xff]
    %v86 = vld [vmem:[%s1 + $0x38] sm:$0xff]
    %v87 = vld [vmem:[%s1 + $0x40] sm:$0xff]
    %v88 = vld [vmem:[%s1 + $0x48] sm:$0xff]
    %v89 = vld [vmem:[%s1 + $0x50] sm:$0xff]
    %v90 = vld [vmem:[%s1 + $0x58] sm:$0xff]
    %v91 = vld [vmem:[%s1 + $0x60] sm:$0xff]
    %v92 = vld [vmem:[%s1 + $0x68] sm:$0xff]
    %v93 = vld [vmem:[%s1 + $0x70] sm:$0xff]
    %v94 = vld [vmem:[%s1 + $0x78] sm:$0xff]
    %v95 = vpack.c.bf16 %v80, %v79
    %v96 = vpack.c.bf16 %v82, %v81
    %v97 = vpack.c.bf16 %v84, %v83
    %v98 = vpack.c.bf16 %v86, %v85
    %v99 = vpack.c.bf16 %v88, %v87
    %v100 = vpack.c.bf16 %v90, %v89
    %v101 = vpack.c.bf16 %v92, %v91
    %v102 = vpack.c.bf16 %v94, %v93
    %v103 = vld [vmem:[%s3] sm:$0xf]
    %v104 = vld [vmem:[%s4] sm:$0x1]
    %v106 = vlaneseq
    %v107 = vshrl.u32 %v106, 7
    %v108 = vsub.s32 0, %v107
    %v109 = vrot.slane %v104, %v108
    %vm111 = vcmask 64512
    %v113 = vsel %vm111, %v95, 0
    %v116 = vsel %vm111, %v96, 0
    %v119 = vsel %vm111, %v97, 0
    %v122 = vsel %vm111, %v98, 0
    %v125 = vsel %vm111, %v99, 0
    %v128 = vsel %vm111, %v100, 0
    %v131 = vsel %vm111, %v101, 0
    %v134 = vsel %vm111, %v102, 0
    %vm136 = vcmask 1043456
    %v138 = vsel %vm136, %v103, 0
    %140 = vmatprep.subr.bf16.mxu0 0
    %141 = vmatpush1.bf16.msra.mxu0 %v138
    %142 = vmatprep.subr.bf16.mxu0 0
    %143 = vmatpush1.bf16.msra.mxu0 0
    %144 = vmatprep.subr.bf16.mxu0 0
    %145 = vmatpush1.bf16.msra.mxu0 0
    %146 = vmatprep.subr.bf16.mxu0 0
    %147 = vmatpush1.bf16.msra.mxu0 0
    %148 = vmatprep.subr.bf16.mxu0 0
    %149 = vmatpush1.bf16.msra.mxu0 0
    %150 = vmatprep.subr.bf16.mxu0 0
    %151 = vmatpush1.bf16.msra.mxu0 0
    %152 = vmatprep.subr.bf16.mxu0 0
    %153 = vmatpush1.bf16.msra.mxu0 0
    %154 = vmatprep.subr.bf16.mxu0 0
    %155 = vmatpush1.bf16.msra.mxu0 0
    %156 = vmatprep.subr.bf16.mxu0 0
    %157 = vmatpush1.bf16.msra.mxu0 0
    %158 = vmatprep.subr.bf16.mxu0 0
    %159 = vmatpush1.bf16.msra.mxu0 0
    %160 = vmatprep.subr.bf16.mxu0 0
    %161 = vmatpush1.bf16.msra.mxu0 0
    %162 = vmatprep.subr.bf16.mxu0 0
    %163 = vmatpush1.bf16.msra.mxu0 0
    %164 = vmatprep.subr.bf16.mxu0 0
    %165 = vmatpush1.bf16.msra.mxu0 0
    %166 = vmatprep.subr.bf16.mxu0 0
    %167 = vmatpush1.bf16.msra.mxu0 0
    %168 = vmatprep.subr.bf16.mxu0 0
    %169 = vmatpush1.bf16.msra.mxu0 0
    %170 = vmatprep.subr.bf16.mxu0 0
    %171 = vmatpush1.bf16.msra.mxu0 0
    %172 = vmatprep.mubr.bf16.mxu0 0
    %173 = vmatmul.mubr.bf16.gmra.mrb[0].mxu0 %v113
    %v174 = vpop.f32.mrb[0].mxu0
    %v175 = vadd.f32 %v109, %v174
    %v176 = vpop.f32.mrb[0].mxu0
    %v177 = vpop.f32.mrb[0].mxu0
    %v178 = vadd.f32 %v109, %v177
    %v179 = vpop.f32.mrb[0].mxu0
    %180 = vmatprep.mubr.bf16.mxu0 0
    %181 = vmatmul.mubr.bf16.gmra.mrb[0].mxu0 %v116
    %v182 = vpop.f32.mrb[0].mxu0
    %v183 = vadd.f32 %v109, %v182
    %v184 = vpop.f32.mrb[0].mxu0
    %v185 = vpop.f32.mrb[0].mxu0
    %v186 = vadd.f32 %v109, %v185
    %v187 = vpop.f32.mrb[0].mxu0
    %188 = vmatprep.mubr.bf16.mxu0 0
    %189 = vmatmul.mubr.bf16.gmra.mrb[0].mxu0 %v119
    %v190 = vpop.f32.mrb[0].mxu0
    %v191 = vadd.f32 %v109, %v190
    %v192 = vpop.f32.mrb[0].mxu0
    %v193 = vpop.f32.mrb[0].mxu0
    %v194 = vadd.f32 %v109, %v193
    %v195 = vpop.f32.mrb[0].mxu0
    %196 = vmatprep.mubr.bf16.mxu0 0
    %197 = vmatmul.mubr.bf16.gmra.mrb[0].mxu0 %v122
    %v198 = vpop.f32.mrb[0].mxu0
    %v199 = vadd.f32 %v109, %v198
    %v200 = vpop.f32.mrb[0].mxu0
    %v201 = vpop.f32.mrb[0].mxu0
    %v202 = vadd.f32 %v109, %v201
    %v203 = vpop.f32.mrb[0].mxu0
    %204 = vmatprep.mubr.bf16.mxu0 0
    %205 = vmatmul.mubr.bf16.gmra.mrb[0].mxu0 %v125
    %v206 = vpop.f32.mrb[0].mxu0
    %v207 = vadd.f32 %v109, %v206
    %v208 = vpop.f32.mrb[0].mxu0
    %v209 = vpop.f32.mrb[0].mxu0
    %v210 = vadd.f32 %v109, %v209
    %v211 = vpop.f32.mrb[0].mxu0
    %212 = vmatprep.mubr.bf16.mxu0 0
    %213 = vmatmul.mubr.bf16.gmra.mrb[0].mxu0 %v128
    %v214 = vpop.f32.mrb[0].mxu0
    %v215 = vadd.f32 %v109, %v214
    %v216 = vpop.f32.mrb[0].mxu0
    %v217 = vpop.f32.mrb[0].mxu0
    %v218 = vadd.f32 %v109, %v217
    %v219 = vpop.f32.mrb[0].mxu0
    %220 = vmatprep.mubr.bf16.mxu0 0
    %221 = vmatmul.mubr.bf16.gmra.mrb[0].mxu0 %v131
    %v222 = vpop.f32.mrb[0].mxu0
    %v223 = vadd.f32 %v109, %v222
    %v224 = vpop.f32.mrb[0].mxu0
    %v225 = vpop.f32.mrb[0].mxu0
    %v226 = vadd.f32 %v109, %v225
    %v227 = vpop.f32.mrb[0].mxu0
    %228 = vmatprep.mubr.bf16.mxu0 0
    %229 = vmatmul.mubr.bf16.gmra.mrb[0].mxu0 %v134
    %v230 = vpop.f32.mrb[0].mxu0
    %v231 = vadd.f32 %v109, %v230
    %v232 = vpop.f32.mrb[0].mxu0
    %v233 = vpop.f32.mrb[0].mxu0
    %v234 = vadd.f32 %v109, %v233
    %v235 = vpop.f32.mrb[0].mxu0
    %236 = vdwg.mxu0
    %v237 = vpack.c.bf16 %v178, %v175
    %v238 = vpack.c.bf16 %v186, %v183
    %v239 = vpack.c.bf16 %v194, %v191
    %v240 = vpack.c.bf16 %v202, %v199
    %v241 = vpack.c.bf16 %v210, %v207
    %v242 = vpack.c.bf16 %v218, %v215
    %v243 = vpack.c.bf16 %v226, %v223
    %v244 = vpack.c.bf16 %v234, %v231
    %v245 = vld [vmem:[%s5] sm:$0xf]
    %v246 = vld [vmem:[%s5 + $0x4] sm:$0xf]
    %v247 = vld [vmem:[%s5 + $0x8] sm:$0xf]
    %v248 = vld [vmem:[%s5 + $0xc] sm:$0xf]
    %v249 = vld [vmem:[%s5 + $0x10] sm:$0xf]
    %v250 = vld [vmem:[%s5 + $0x14] sm:$0xf]
    %v251 = vld [vmem:[%s5 + $0x18] sm:$0xf]
    %v252 = vld [vmem:[%s5 + $0x1c] sm:$0xf]
    %v253 = vld [vmem:[%s5 + $0x20] sm:$0xf]
    %v254 = vld [vmem:[%s5 + $0x24] sm:$0xf]
    %v255 = vld [vmem:[%s5 + $0x28] sm:$0xf]
    %v256 = vld [vmem:[%s5 + $0x2c] sm:$0xf]
    %v257 = vld [vmem:[%s5 + $0x30] sm:$0xf]
    %v258 = vld [vmem:[%s5 + $0x34] sm:$0xf]
    %v259 = vld [vmem:[%s5 + $0x38] sm:$0xf]
    %v260 = vld [vmem:[%s5 + $0x3c] sm:$0xf]
    %v261 = vld [vmem:[%s6] sm:$0x1]
    %v263 = vlaneseq
    %v264 = vshrl.u32 %v263, 7
    %v265 = vsub.s32 0, %v264
    %v266 = vrot.slane %v261, %v265
    %v284 = vunpack.c.l.b16 %v245
    %v285 = vunpack.c.l.b16 %v246
    %v286 = vunpack.c.l.b16 %v247
    %v287 = vunpack.c.l.b16 %v248
    %v288 = vunpack.c.l.b16 %v249
    %v289 = vunpack.c.l.b16 %v250
    %v290 = vunpack.c.l.b16 %v251
    %v291 = vunpack.c.l.b16 %v252
    %v292 = vunpack.c.l.b16 %v253
    %v293 = vunpack.c.l.b16 %v254
    %v294 = vunpack.c.l.b16 %v255
    %v295 = vunpack.c.l.b16 %v256
    %v296 = vunpack.c.l.b16 %v257
    %v297 = vunpack.c.l.b16 %v258
    %v298 = vunpack.c.l.b16 %v259
    %v299 = vunpack.c.l.b16 %v260
    %v300 = vpack.c.b16 %v285, %v284
    %v301 = vpack.c.b16 %v287, %v286
    %v302 = vpack.c.b16 %v289, %v288
    %v303 = vpack.c.b16 %v291, %v290
    %v304 = vpack.c.b16 %v293, %v292
    %v305 = vpack.c.b16 %v295, %v294
    %v306 = vpack.c.b16 %v297, %v296
    %v307 = vpack.c.b16 %v299, %v298
    %316 = vmatprep.subr.bf16.mxu0 0
    %317 = vmatpush1.bf16.msra.mxu0 %v300
    %318 = vmatprep.subr.bf16.mxu0 0
    %319 = vmatpush1.bf16.msra.mxu0 %v301
    %320 = vmatprep.subr.bf16.mxu0 0
    %321 = vmatpush1.bf16.msra.mxu0 %v302
    %322 = vmatprep.subr.bf16.mxu0 0
    %323 = vmatpush1.bf16.msra.mxu0 %v303
    %324 = vmatprep.subr.bf16.mxu0 0
    %325 = vmatpush1.bf16.msra.mxu0 %v304
    %326 = vmatprep.subr.bf16.mxu0 0
    %327 = vmatpush1.bf16.msra.mxu0 %v305
    %328 = vmatprep.subr.bf16.mxu0 0
    %329 = vmatpush1.bf16.msra.mxu0 %v306
    %330 = vmatprep.subr.bf16.mxu0 0
    %331 = vmatpush1.bf16.msra.mxu0 %v307
    %332 = vmatprep.subr.bf16.mxu0 0
    %333 = vmatpush1.bf16.msra.mxu0 0
    %334 = vmatprep.subr.bf16.mxu0 0
    %335 = vmatpush1.bf16.msra.mxu0 0
    %336 = vmatprep.subr.bf16.mxu0 0
    %337 = vmatpush1.bf16.msra.mxu0 0
    %338 = vmatprep.subr.bf16.mxu0 0
    %339 = vmatpush1.bf16.msra.mxu0 0
    %340 = vmatprep.subr.bf16.mxu0 0
    %341 = vmatpush1.bf16.msra.mxu0 0
    %342 = vmatprep.subr.bf16.mxu0 0
    %343 = vmatpush1.bf16.msra.mxu0 0
    %344 = vmatprep.subr.bf16.mxu0 0
    %345 = vmatpush1.bf16.msra.mxu0 0
    %346 = vmatprep.subr.bf16.mxu0 0
    %347 = vmatpush1.bf16.msra.mxu0 0
    %348 = vmatprep.mubr.bf16.mxu0 0
    %349 = vmatmul.mubr.bf16.gmra.mrb[0].mxu0 %v237
    %v350 = vpop.f32.mrb[0].mxu0
    %v351 = vadd.f32 %v266, %v350
    %v352 = vpop.f32.mrb[0].mxu0
    %v353 = vpop.f32.mrb[0].mxu0
    %v354 = vadd.f32 %v266, %v353
    %v355 = vpop.f32.mrb[0].mxu0
    %356 = vmatprep.mubr.bf16.mxu0 0
    %357 = vmatmul.mubr.bf16.gmra.mrb[0].mxu0 %v238
    %v358 = vpop.f32.mrb[0].mxu0
    %v359 = vadd.f32 %v266, %v358
    %v360 = vpop.f32.mrb[0].mxu0
    %v361 = vpop.f32.mrb[0].mxu0
    %v362 = vadd.f32 %v266, %v361
    %v363 = vpop.f32.mrb[0].mxu0
    %364 = vmatprep.mubr.bf16.mxu0 0
    %365 = vmatmul.mubr.bf16.gmra.mrb[0].mxu0 %v239
    %v366 = vpop.f32.mrb[0].mxu0
    %v367 = vadd.f32 %v266, %v366
    %v368 = vpop.f32.mrb[0].mxu0
    %v369 = vpop.f32.mrb[0].mxu0
    %v370 = vadd.f32 %v266, %v369
    %v371 = vpop.f32.mrb[0].mxu0
    %372 = vmatprep.mubr.bf16.mxu0 0
    %373 = vmatmul.mubr.bf16.gmra.mrb[0].mxu0 %v240
    %v374 = vpop.f32.mrb[0].mxu0
    %v375 = vadd.f32 %v266, %v374
    %v376 = vpop.f32.mrb[0].mxu0
    %v377 = vpop.f32.mrb[0].mxu0
    %v378 = vadd.f32 %v266, %v377
    %v379 = vpop.f32.mrb[0].mxu0
    %380 = vmatprep.mubr.bf16.mxu0 0
    %381 = vmatmul.mubr.bf16.gmra.mrb[0].mxu0 %v241
    %v382 = vpop.f32.mrb[0].mxu0
    %v383 = vadd.f32 %v266, %v382
    %v384 = vpop.f32.mrb[0].mxu0
    %v385 = vpop.f32.mrb[0].mxu0
    %v386 = vadd.f32 %v266, %v385
    %v387 = vpop.f32.mrb[0].mxu0
    %388 = vmatprep.mubr.bf16.mxu0 0
    %389 = vmatmul.mubr.bf16.gmra.mrb[0].mxu0 %v242
    %v390 = vpop.f32.mrb[0].mxu0
    %v391 = vadd.f32 %v266, %v390
    %v392 = vpop.f32.mrb[0].mxu0
    %v393 = vpop.f32.mrb[0].mxu0
    %v394 = vadd.f32 %v266, %v393
    %v395 = vpop.f32.mrb[0].mxu0
    %396 = vmatprep.mubr.bf16.mxu0 0
    %397 = vmatmul.mubr.bf16.gmra.mrb[0].mxu0 %v243
    %v398 = vpop.f32.mrb[0].mxu0
    %v399 = vadd.f32 %v266, %v398
    %v400 = vpop.f32.mrb[0].mxu0
    %v401 = vpop.f32.mrb[0].mxu0
    %v402 = vadd.f32 %v266, %v401
    %v403 = vpop.f32.mrb[0].mxu0
    %404 = vmatprep.mubr.bf16.mxu0 0
    %405 = vmatmul.mubr.bf16.gmra.mrb[0].mxu0 %v244
    %v406 = vpop.f32.mrb[0].mxu0
    %v407 = vadd.f32 %v266, %v406
    %v408 = vpop.f32.mrb[0].mxu0
    %v409 = vpop.f32.mrb[0].mxu0
    %v410 = vadd.f32 %v266, %v409
    %v411 = vpop.f32.mrb[0].mxu0
    %412 = vdwg.mxu0
    %v413 = vmax.f32 %v351, 0.0
    %v414 = vmax.f32 %v354, 0.0
    %v415 = vmax.f32 %v359, 0.0
    %v416 = vmax.f32 %v362, 0.0
    %v417 = vmax.f32 %v367, 0.0
    %v418 = vmax.f32 %v370, 0.0
    %v419 = vmax.f32 %v375, 0.0
    %v420 = vmax.f32 %v378, 0.0
    %v421 = vmax.f32 %v383, 0.0
    %v422 = vmax.f32 %v386, 0.0
    %v423 = vmax.f32 %v391, 0.0
    %v424 = vmax.f32 %v394, 0.0
    %v425 = vmax.f32 %v399, 0.0
    %v426 = vmax.f32 %v402, 0.0
    %v427 = vmax.f32 %v407, 0.0
    %v428 = vmax.f32 %v410, 0.0
    %v429 = vpack.c.bf16 %v414, %v413
    %v430 = vpack.c.bf16 %v416, %v415
    %v431 = vpack.c.bf16 %v418, %v417
    %v432 = vpack.c.bf16 %v420, %v419
    %v433 = vpack.c.bf16 %v422, %v421
    %v434 = vpack.c.bf16 %v424, %v423
    %v435 = vpack.c.bf16 %v426, %v425
    %v436 = vpack.c.bf16 %v428, %v427
    %v437 = vld [vmem:[%s7] sm:$0xf]
    %v438 = vld [vmem:[%s7 + $0x4] sm:$0xf]
    %v439 = vld [vmem:[%s7 + $0x8] sm:$0xf]
    %v440 = vld [vmem:[%s7 + $0xc] sm:$0xf]
    %v441 = vld [vmem:[%s7 + $0x10] sm:$0xf]
    %v442 = vld [vmem:[%s7 + $0x14] sm:$0xf]
    %v443 = vld [vmem:[%s7 + $0x18] sm:$0xf]
    %v444 = vld [vmem:[%s7 + $0x1c] sm:$0xf]
    %v445 = vld [vmem:[%s7 + $0x20] sm:$0xf]
    %v446 = vld [vmem:[%s7 + $0x24] sm:$0xf]
    %v447 = vld [vmem:[%s7 + $0x28] sm:$0xf]
    %v448 = vld [vmem:[%s7 + $0x2c] sm:$0xf]
    %v449 = vld [vmem:[%s7 + $0x30] sm:$0xf]
    %v450 = vld [vmem:[%s7 + $0x34] sm:$0xf]
    %v451 = vld [vmem:[%s7 + $0x38] sm:$0xf]
    %v452 = vld [vmem:[%s7 + $0x3c] sm:$0xf]
    %v453 = vld [vmem:[%s8] sm:$0x1]
    %v455 = vlaneseq
    %v456 = vshrl.u32 %v455, 7
    %v457 = vsub.s32 0, %v456
    %v458 = vrot.slane %v453, %v457
    %v476 = vunpack.c.l.b16 %v437
    %v477 = vunpack.c.l.b16 %v438
    %v478 = vunpack.c.l.b16 %v439
    %v479 = vunpack.c.l.b16 %v440
    %v480 = vunpack.c.l.b16 %v441
    %v481 = vunpack.c.l.b16 %v442
    %v482 = vunpack.c.l.b16 %v443
    %v483 = vunpack.c.l.b16 %v444
    %v484 = vunpack.c.l.b16 %v445
    %v485 = vunpack.c.l.b16 %v446
    %v486 = vunpack.c.l.b16 %v447
    %v487 = vunpack.c.l.b16 %v448
    %v488 = vunpack.c.l.b16 %v449
    %v489 = vunpack.c.l.b16 %v450
    %v490 = vunpack.c.l.b16 %v451
    %v491 = vunpack.c.l.b16 %v452
    %v492 = vpack.c.b16 %v477, %v476
    %v493 = vpack.c.b16 %v479, %v478
    %v494 = vpack.c.b16 %v481, %v480
    %v495 = vpack.c.b16 %v483, %v482
    %v496 = vpack.c.b16 %v485, %v484
    %v497 = vpack.c.b16 %v487, %v486
    %v498 = vpack.c.b16 %v489, %v488
    %v499 = vpack.c.b16 %v491, %v490
    %508 = vmatprep.subr.bf16.mxu0 0
    %509 = vmatpush1.bf16.msra.mxu0 %v492
    %510 = vmatprep.subr.bf16.mxu0 0
    %511 = vmatpush1.bf16.msra.mxu0 %v493
    %512 = vmatprep.subr.bf16.mxu0 0
    %513 = vmatpush1.bf16.msra.mxu0 %v494
    %514 = vmatprep.subr.bf16.mxu0 0
    %515 = vmatpush1.bf16.msra.mxu0 %v495
    %516 = vmatprep.subr.bf16.mxu0 0
    %517 = vmatpush1.bf16.msra.mxu0 %v496
    %518 = vmatprep.subr.bf16.mxu0 0
    %519 = vmatpush1.bf16.msra.mxu0 %v497
    %520 = vmatprep.subr.bf16.mxu0 0
    %521 = vmatpush1.bf16.msra.mxu0 %v498
    %522 = vmatprep.subr.bf16.mxu0 0
    %523 = vmatpush1.bf16.msra.mxu0 %v499
    %524 = vmatprep.subr.bf16.mxu0 0
    %525 = vmatpush1.bf16.msra.mxu0 0
    %526 = vmatprep.subr.bf16.mxu0 0
    %527 = vmatpush1.bf16.msra.mxu0 0
    %528 = vmatprep.subr.bf16.mxu0 0
    %529 = vmatpush1.bf16.msra.mxu0 0
    %530 = vmatprep.subr.bf16.mxu0 0
    %531 = vmatpush1.bf16.msra.mxu0 0
    %532 = vmatprep.subr.bf16.mxu0 0
    %533 = vmatpush1.bf16.msra.mxu0 0
    %534 = vmatprep.subr.bf16.mxu0 0
    %535 = vmatpush1.bf16.msra.mxu0 0
    %536 = vmatprep.subr.bf16.mxu0 0
    %537 = vmatpush1.bf16.msra.mxu0 0
    %538 = vmatprep.subr.bf16.mxu0 0
    %539 = vmatpush1.bf16.msra.mxu0 0
    %540 = vmatprep.mubr.bf16.mxu0 0
    %541 = vmatmul.mubr.bf16.gmra.mrb[0].mxu0 %v429
    %v542 = vpop.f32.mrb[0].mxu0
    %v543 = vadd.f32 %v458, %v542
    %v544 = vpop.f32.mrb[0].mxu0
    %v545 = vpop.f32.mrb[0].mxu0
    %v546 = vadd.f32 %v458, %v545
    %v547 = vpop.f32.mrb[0].mxu0
    %548 = vmatprep.mubr.bf16.mxu0 0
    %549 = vmatmul.mubr.bf16.gmra.mrb[0].mxu0 %v430
    %v550 = vpop.f32.mrb[0].mxu0
    %v551 = vadd.f32 %v458, %v550
    %v552 = vpop.f32.mrb[0].mxu0
    %v553 = vpop.f32.mrb[0].mxu0
    %v554 = vadd.f32 %v458, %v553
    %v555 = vpop.f32.mrb[0].mxu0
    %556 = vmatprep.mubr.bf16.mxu0 0
    %557 = vmatmul.mubr.bf16.gmra.mrb[0].mxu0 %v431
    %v558 = vpop.f32.mrb[0].mxu0
    %v559 = vadd.f32 %v458, %v558
    %v560 = vpop.f32.mrb[0].mxu0
    %v561 = vpop.f32.mrb[0].mxu0
    %v562 = vadd.f32 %v458, %v561
    %v563 = vpop.f32.mrb[0].mxu0
    %564 = vmatprep.mubr.bf16.mxu0 0
    %565 = vmatmul.mubr.bf16.gmra.mrb[0].mxu0 %v432
    %v566 = vpop.f32.mrb[0].mxu0
    %v567 = vadd.f32 %v458, %v566
    %v568 = vpop.f32.mrb[0].mxu0
    %v569 = vpop.f32.mrb[0].mxu0
    %v570 = vadd.f32 %v458, %v569
    %v571 = vpop.f32.mrb[0].mxu0
    %572 = vmatprep.mubr.bf16.mxu0 0
    %573 = vmatmul.mubr.bf16.gmra.mrb[0].mxu0 %v433
    %v574 = vpop.f32.mrb[0].mxu0
    %v575 = vadd.f32 %v458, %v574
    %v576 = vpop.f32.mrb[0].mxu0
    %v577 = vpop.f32.mrb[0].mxu0
    %v578 = vadd.f32 %v458, %v577
    %v579 = vpop.f32.mrb[0].mxu0
    %580 = vmatprep.mubr.bf16.mxu0 0
    %581 = vmatmul.mubr.bf16.gmra.mrb[0].mxu0 %v434
    %v582 = vpop.f32.mrb[0].mxu0
    %v583 = vadd.f32 %v458, %v582
    %v584 = vpop.f32.mrb[0].mxu0
    %v585 = vpop.f32.mrb[0].mxu0
    %v586 = vadd.f32 %v458, %v585
    %v587 = vpop.f32.mrb[0].mxu0
    %588 = vmatprep.mubr.bf16.mxu0 0
    %589 = vmatmul.mubr.bf16.gmra.mrb[0].mxu0 %v435
    %v590 = vpop.f32.mrb[0].mxu0
    %v591 = vadd.f32 %v458, %v590
    %v592 = vpop.f32.mrb[0].mxu0
    %v593 = vpop.f32.mrb[0].mxu0
    %v594 = vadd.f32 %v458, %v593
    %v595 = vpop.f32.mrb[0].mxu0
    %596 = vmatprep.mubr.bf16.mxu0 0
    %597 = vmatmul.mubr.bf16.gmra.mrb[0].mxu0 %v436
    %v598 = vpop.f32.mrb[0].mxu0
    %v599 = vadd.f32 %v458, %v598
    %v600 = vpop.f32.mrb[0].mxu0
    %v601 = vpop.f32.mrb[0].mxu0
    %v602 = vadd.f32 %v458, %v601
    %v603 = vpop.f32.mrb[0].mxu0
    %604 = vdwg.mxu0
    %v605 = vld [vmem:[%s0] sm:$0x1]
    %v606 = vlaneseq
    %v607 = vshrl.u32 %v606, 7
    %v608 = vlaneseq
    %v609 = vshrl.u32 %v608, 7
    %v610 = vsub.s32 0, %v609
    %v611 = vrot.slane %v605, %v610
    %vm612 = vcmp.eq.s32.totalorder %v607, %v611
    %v613 = vsel %vm612, 1, 0
    %v614 = vcvt.s32.f32 %v613
    %v615 = vpack.c.bf16 %v614, %v614
    %v616 = vld [vmem:[#allocation2] sm:$0xff]
    %v617 = vpack.c.bf16 %v546, %v543
    %v618 = vpack.c.bf16 %v554, %v551
    %v619 = vpack.c.bf16 %v562, %v559
    %v620 = vpack.c.bf16 %v570, %v567
    %v621 = vpack.c.bf16 %v578, %v575
    %v622 = vpack.c.bf16 %v586, %v583
    %v623 = vpack.c.bf16 %v594, %v591
    %v624 = vpack.c.bf16 %v602, %v599
    %625 = vmatprep.subr.bf16.mxu0 0
    %626 = vmatpush1.bf16.msra.mxu0 %v617
    %627 = vmatprep.subr.bf16.mxu0 0
    %628 = vmatpush1.bf16.msra.mxu0 %v618
    %629 = vmatprep.subr.bf16.mxu0 0
    %630 = vmatpush1.bf16.msra.mxu0 %v619
    %631 = vmatprep.subr.bf16.mxu0 0
    %632 = vmatpush1.bf16.msra.mxu0 %v620
    %633 = vmatprep.subr.bf16.mxu0 0
    %634 = vmatpush1.bf16.msra.mxu0 %v621
    %635 = vmatprep.subr.bf16.mxu0 0
    %636 = vmatpush1.bf16.msra.mxu0 %v622
    %637 = vmatprep.subr.bf16.mxu0 0
    %638 = vmatpush1.bf16.msra.mxu0 %v623
    %639 = vmatprep.subr.bf16.mxu0 0
    %640 = vmatpush1.bf16.msra.mxu0 %v624
    %641 = vmatprep.subr.bf16.mxu0 0
    %642 = vmatpush1.bf16.msra.mxu0 0
    %643 = vmatprep.subr.bf16.mxu0 0
    %644 = vmatpush1.bf16.msra.mxu0 0
    %645 = vmatprep.subr.bf16.mxu0 0
    %646 = vmatpush1.bf16.msra.mxu0 0
    %647 = vmatprep.subr.bf16.mxu0 0
    %648 = vmatpush1.bf16.msra.mxu0 0
    %649 = vmatprep.subr.bf16.mxu0 0
    %650 = vmatpush1.bf16.msra.mxu0 0
    %651 = vmatprep.subr.bf16.mxu0 0
    %652 = vmatpush1.bf16.msra.mxu0 0
    %653 = vmatprep.subr.bf16.mxu0 0
    %654 = vmatpush1.bf16.msra.mxu0 0
    %655 = vmatprep.subr.bf16.mxu0 0
    %656 = vmatpush1.bf16.msra.mxu0 0
    %657 = vmatprep.mubr.bf16.mxu0 0
    %658 = vmatmul.mubr.bf16.gmra.mrb[0].mxu0 %v615
    %v659 = vpop.f32.mrb[0].mxu0
    %v660 = vadd.f32 0.0, %v659
    %v661 = vpop.f32.mrb[0].mxu0
    %v662 = vpop.f32.mrb[0].mxu0
    %v663 = vpop.f32.mrb[0].mxu0
    %664 = vdwg.mxu0
    %v665 = vadd.f32 %v616, %v660
    %666 = vst [vmem:[#allocation2] sm:$0xff] %v665
    // Predicated region
    $region66: #{tpu_custom_call.1} parent=1 // pred_check
      %p667 = pneg %p74
    $region67: #{tpu_custom_call.1} parent=1 // pred_check_branch
      %669 = sbr.rel (%p667) target = $region69
    $region68: #{tpu_custom_call.1} parent=1 // pred_region
      %v670 = vld [vmem:[#allocation2] sm:$0xff]
      %v671 = vld [vmem:[%s2] sm:$0xff]
      %v672 = vmax.f32 %v671, 1.0
      %674 = vset.pattern.permute.xlu0 0
      %675 = vperm.xlu0 %674, %v672
      %v676 = vpop.permute.xlu0 %675
      %v678 = vrcp.pop %v676
      %v679 = vmul.f32 %v670, %v678
      %v680 = vpack.c.bf16 %v679, %v679
      %v681 = vld [vmem:[#allocation3] sm:$0xf]
      %v682 = vld [vmem:[#allocation3 + $0x4] sm:$0xf]
      %v683 = vld [vmem:[#allocation3 + $0x8] sm:$0xf]
      %v684 = vld [vmem:[#allocation3 + $0xc] sm:$0xf]
      %v685 = vld [vmem:[#allocation3 + $0x10] sm:$0xf]
      %v686 = vld [vmem:[#allocation3 + $0x14] sm:$0xf]
      %v687 = vld [vmem:[#allocation3 + $0x18] sm:$0xf]
      %v688 = vld [vmem:[#allocation3 + $0x1c] sm:$0xf]
      %v689 = vld [vmem:[#allocation3 + $0x20] sm:$0xf]
      %v690 = vld [vmem:[#allocation3 + $0x24] sm:$0xf]
      %v691 = vld [vmem:[#allocation3 + $0x28] sm:$0xf]
      %v692 = vld [vmem:[#allocation3 + $0x2c] sm:$0xf]
      %v693 = vld [vmem:[#allocation3 + $0x30] sm:$0xf]
      %v694 = vld [vmem:[#allocation3 + $0x34] sm:$0xf]
      %v695 = vld [vmem:[#allocation3 + $0x38] sm:$0xf]
      %v696 = vld [vmem:[#allocation3 + $0x3c] sm:$0xf]
      %v697 = vld [vmem:[%s10] sm:$0x1]
      %v699 = vlaneseq
      %v700 = vshrl.u32 %v699, 7
      %v701 = vsub.s32 0, %v700
      %v702 = vrot.slane %v697, %v701
      %v720 = vunpack.c.l.b16 %v681
      %v721 = vunpack.c.l.b16 %v682
      %v722 = vunpack.c.l.b16 %v683
      %v723 = vunpack.c.l.b16 %v684
      %v724 = vunpack.c.l.b16 %v685
      %v725 = vunpack.c.l.b16 %v686
      %v726 = vunpack.c.l.b16 %v687
      %v727 = vunpack.c.l.b16 %v688
      %v728 = vunpack.c.l.b16 %v689
      %v729 = vunpack.c.l.b16 %v690
      %v730 = vunpack.c.l.b16 %v691
      %v731 = vunpack.c.l.b16 %v692
      %v732 = vunpack.c.l.b16 %v693
      %v733 = vunpack.c.l.b16 %v694
      %v734 = vunpack.c.l.b16 %v695
      %v735 = vunpack.c.l.b16 %v696
      %v736 = vpack.c.b16 %v721, %v720
      %v737 = vpack.c.b16 %v723, %v722
      %v738 = vpack.c.b16 %v725, %v724
      %v739 = vpack.c.b16 %v727, %v726
      %v740 = vpack.c.b16 %v729, %v728
      %v741 = vpack.c.b16 %v731, %v730
      %v742 = vpack.c.b16 %v733, %v732
      %v743 = vpack.c.b16 %v735, %v734
      %752 = vmatprep.subr.bf16.mxu0 0
      %753 = vmatpush1.bf16.msra.mxu0 %v736
      %754 = vmatprep.subr.bf16.mxu0 0
      %755 = vmatpush1.bf16.msra.mxu0 %v737
      %756 = vmatprep.subr.bf16.mxu0 0
      %757 = vmatpush1.bf16.msra.mxu0 %v738
      %758 = vmatprep.subr.bf16.mxu0 0
      %759 = vmatpush1.bf16.msra.mxu0 %v739
      %760 = vmatprep.subr.bf16.mxu0 0
      %761 = vmatpush1.bf16.msra.mxu0 %v740
      %762 = vmatprep.subr.bf16.mxu0 0
      %763 = vmatpush1.bf16.msra.mxu0 %v741
      %764 = vmatprep.subr.bf16.mxu0 0
      %765 = vmatpush1.bf16.msra.mxu0 %v742
      %766 = vmatprep.subr.bf16.mxu0 0
      %767 = vmatpush1.bf16.msra.mxu0 %v743
      %768 = vmatprep.subr.bf16.mxu0 0
      %769 = vmatpush1.bf16.msra.mxu0 0
      %770 = vmatprep.subr.bf16.mxu0 0
      %771 = vmatpush1.bf16.msra.mxu0 0
      %772 = vmatprep.subr.bf16.mxu0 0
      %773 = vmatpush1.bf16.msra.mxu0 0
      %774 = vmatprep.subr.bf16.mxu0 0
      %775 = vmatpush1.bf16.msra.mxu0 0
      %776 = vmatprep.subr.bf16.mxu0 0
      %777 = vmatpush1.bf16.msra.mxu0 0
      %778 = vmatprep.subr.bf16.mxu0 0
      %779 = vmatpush1.bf16.msra.mxu0 0
      %780 = vmatprep.subr.bf16.mxu0 0
      %781 = vmatpush1.bf16.msra.mxu0 0
      %782 = vmatprep.subr.bf16.mxu0 0
      %783 = vmatpush1.bf16.msra.mxu0 0
      %784 = vmatprep.mubr.bf16.mxu0 0
      %785 = vmatmul.mubr.bf16.gmra.mrb[0].mxu0 %v680
      %v786 = vpop.f32.mrb[0].mxu0
      %v787 = vadd.f32 %v702, %v786
      %v788 = vpop.f32.mrb[0].mxu0
      %v789 = vpop.f32.mrb[0].mxu0
      %v790 = vpop.f32.mrb[0].mxu0
      %791 = vdwg.mxu0
      %v792 = vmax.f32 %v787, 0.0
      %v793 = vpack.c.bf16 %v792, %v792
      %v794 = vld [vmem:[#allocation6] sm:$0xf]
      %v795 = vld [vmem:[#allocation6 + $0x4] sm:$0xf]
      %v796 = vld [vmem:[#allocation6 + $0x8] sm:$0xf]
      %v797 = vld [vmem:[#allocation6 + $0xc] sm:$0xf]
      %v798 = vld [vmem:[#allocation6 + $0x10] sm:$0xf]
      %v799 = vld [vmem:[#allocation6 + $0x14] sm:$0xf]
      %v800 = vld [vmem:[#allocation6 + $0x18] sm:$0xf]
      %v801 = vld [vmem:[#allocation6 + $0x1c] sm:$0xf]
      %v802 = vld [vmem:[#allocation6 + $0x20] sm:$0xf]
      %v803 = vld [vmem:[#allocation6 + $0x24] sm:$0xf]
      %v804 = vld [vmem:[#allocation6 + $0x28] sm:$0xf]
      %v805 = vld [vmem:[#allocation6 + $0x2c] sm:$0xf]
      %v806 = vld [vmem:[#allocation6 + $0x30] sm:$0xf]
      %v807 = vld [vmem:[#allocation6 + $0x34] sm:$0xf]
      %v808 = vld [vmem:[#allocation6 + $0x38] sm:$0xf]
      %v809 = vld [vmem:[#allocation6 + $0x3c] sm:$0xf]
      %v810 = vld [vmem:[%s12] sm:$0x1]
      %v812 = vlaneseq
      %v813 = vshrl.u32 %v812, 7
      %v814 = vsub.s32 0, %v813
      %v815 = vrot.slane %v810, %v814
      %v833 = vunpack.c.l.b16 %v794
      %v834 = vunpack.c.l.b16 %v795
      %v835 = vunpack.c.l.b16 %v796
      %v836 = vunpack.c.l.b16 %v797
      %v837 = vunpack.c.l.b16 %v798
      %v838 = vunpack.c.l.b16 %v799
      %v839 = vunpack.c.l.b16 %v800
      %v840 = vunpack.c.l.b16 %v801
      %v841 = vunpack.c.l.b16 %v802
      %v842 = vunpack.c.l.b16 %v803
      %v843 = vunpack.c.l.b16 %v804
      %v844 = vunpack.c.l.b16 %v805
      %v845 = vunpack.c.l.b16 %v806
      %v846 = vunpack.c.l.b16 %v807
      %v847 = vunpack.c.l.b16 %v808
      %v848 = vunpack.c.l.b16 %v809
      %v849 = vpack.c.b16 %v834, %v833
      %v850 = vpack.c.b16 %v836, %v835
      %v851 = vpack.c.b16 %v838, %v837
      %v852 = vpack.c.b16 %v840, %v839
      %v853 = vpack.c.b16 %v842, %v841
      %v854 = vpack.c.b16 %v844, %v843
      %v855 = vpack.c.b16 %v846, %v845
      %v856 = vpack.c.b16 %v848, %v847
      %865 = vmatprep.subr.bf16.mxu0 0
      %866 = vmatpush1.bf16.msra.mxu0 %v849
      %867 = vmatprep.subr.bf16.mxu0 0
      %868 = vmatpush1.bf16.msra.mxu0 %v850
      %869 = vmatprep.subr.bf16.mxu0 0
      %870 = vmatpush1.bf16.msra.mxu0 %v851
      %871 = vmatprep.subr.bf16.mxu0 0
      %872 = vmatpush1.bf16.msra.mxu0 %v852
      %873 = vmatprep.subr.bf16.mxu0 0
      %874 = vmatpush1.bf16.msra.mxu0 %v853
      %875 = vmatprep.subr.bf16.mxu0 0
      %876 = vmatpush1.bf16.msra.mxu0 %v854
      %877 = vmatprep.subr.bf16.mxu0 0
      %878 = vmatpush1.bf16.msra.mxu0 %v855
      %879 = vmatprep.subr.bf16.mxu0 0
      %880 = vmatpush1.bf16.msra.mxu0 %v856
      %881 = vmatprep.subr.bf16.mxu0 0
      %882 = vmatpush1.bf16.msra.mxu0 0
      %883 = vmatprep.subr.bf16.mxu0 0
      %884 = vmatpush1.bf16.msra.mxu0 0
      %885 = vmatprep.subr.bf16.mxu0 0
      %886 = vmatpush1.bf16.msra.mxu0 0
      %887 = vmatprep.subr.bf16.mxu0 0
      %888 = vmatpush1.bf16.msra.mxu0 0
      %889 = vmatprep.subr.bf16.mxu0 0
      %890 = vmatpush1.bf16.msra.mxu0 0
      %891 = vmatprep.subr.bf16.mxu0 0
      %892 = vmatpush1.bf16.msra.mxu0 0
      %893 = vmatprep.subr.bf16.mxu0 0
      %894 = vmatpush1.bf16.msra.mxu0 0
      %895 = vmatprep.subr.bf16.mxu0 0
      %896 = vmatpush1.bf16.msra.mxu0 0
      %897 = vmatprep.mubr.bf16.mxu0 0
      %898 = vmatmul.mubr.bf16.gmra.mrb[0].mxu0 %v793
      %v899 = vpop.f32.mrb[0].mxu0
      %v900 = vadd.f32 %v815, %v899
      %v901 = vpop.f32.mrb[0].mxu0
      %v902 = vpop.f32.mrb[0].mxu0
      %v903 = vpop.f32.mrb[0].mxu0
      %904 = vdwg.mxu0
      %905 = vst [vmem:[#allocation8] sm:$0xff] %v900
    $region69: #{tpu_custom_call.1} parent=1 // pred_fallthru
      _
    // Predicated region
    $region70: #{tpu_custom_call.1} parent=1 // pred_check
      _
    $region71: #{tpu_custom_call.1} parent=1 // pred_check_branch
      %907 = sbr.rel (0) target = $region73
    $region72: #{tpu_custom_call.1} parent=1 // pred_region
      %s909 = ssub.s32 128, 128
      %910 = vsyncadd [#allocation5], %s909
      %s912 = sshll.u32 [#allocation8], 4
      %s913 = int_to_ptr.vmem [resolvable:$true] %s912
      %915 = dma.vmem_to_hbm [thread:$0]  %s913, 128, %s13, [#allocation5]
    $region73: #{tpu_custom_call.1} parent=1 // pred_fallthru
      _
    // Predicated region
    $region74: #{tpu_custom_call.1} parent=1 // pred_check
      _
    $region75: #{tpu_custom_call.1} parent=1 // pred_check_branch
      %917 = sbr.rel (0) target = $region77
    $region76: #{tpu_custom_call.1} parent=1 // pred_region
      %918 = dma.done [#allocation5], 128
    $region77: #{tpu_custom_call.1} parent=1 // pred_fallthru
      _
    %919 = vsyncpa [#allocation4], 1
    %920 = vsyncpa [#allocation7], 1
    %921 = vsyncpa [#allocation5], 1

</llo_original>
